<compile_context>
chip_gen: v7x
topology: tpu7x:2x2x1
jax: 0.10.0
libtpu: 0.0.40
codegen_flags: <defaults>
</compile_context>

<pallas_src>
import math

import jax
import jax.numpy as jnp
from jax.experimental import pallas as pl
from jax.experimental.pallas import tpu as pltpu

NEG_SLOPE = 0.02     # LeakyReLU(0.02)
NEG_BIG = -1e30      # bias for padded lanes that must never win an argmax


def _leaky_relu(h):
    return jnp.where(h > 0, h, NEG_SLOPE * h)


def _round_up(x, m):
    return ((x + m - 1) // m) * m


def _pick_block_batch(B, N, target_rows=256):
    """Largest batch tile that divides B, keeps sublanes aligned (multiple of
    8) and keeps ~target_rows node-branch rows per block."""
    cands = [bt for bt in range(8, B + 1, 8) if B % bt == 0]
    if not cands:
        return B
    under = [bt for bt in cands if bt * N <= target_rows]
    return max(under) if under else min(cands)


def _make_kernel(num_edge_types, nn_pad, hard):
    """Fused LatentDecoder kernel. num_edge_types / nn_pad / hard are static."""
    E, NNp = num_edge_types, nn_pad

    def kernel(*refs):
        if hard:
            (z_n_ref, z_a_ref, g_feat_ref, g_adj_ref,
             w1, b1, w2, b2, w3, b3,
             wa1, ba1, wa2, ba2, wa3, ba3,
             feat_ref, adj_ref) = refs
        else:
            (z_n_ref, z_a_ref,
             w1, b1, w2, b2, w3, b3,
             wa1, ba1, wa2, ba2, wa3, ba3,
             feat_ref, adj_ref) = refs

        f32 = jnp.float32
        cd = w1.dtype            # matmul-operand (compute) dtype (bf16 or f32)

        # ------------- node-feature MLP: (Bt*N, L) -> (Bt*N, Fo_pad) ---------
        h = jnp.dot(z_n_ref[...], w1[...], preferred_element_type=f32) + b1[...]
        h = _leaky_relu(h).astype(cd)
        h = jnp.dot(h, w2[...], preferred_element_type=f32) + b2[...]
        h = _leaky_relu(h).astype(cd)
        feat_logits = jnp.dot(h, w3[...], preferred_element_type=f32) + b3[...]

        if hard:
            # gumbel_softmax(hard=True, dim=-1) forward == one-hot of
            # argmax(logits + g) (tau = 1), first-max tie-break.
            v = feat_logits + g_feat_ref[...]
            m = jnp.max(v, axis=-1, keepdims=True)
            lane = jax.lax.broadcasted_iota(jnp.int32, v.shape, 1)
            first = jnp.min(jnp.where(v == m, lane, v.shape[-1]),
                            axis=-1, keepdims=True)
            feat_ref[...] = (lane == first).astype(feat_ref.dtype)
        else:
            feat_ref[...] = feat_logits.astype(feat_ref.dtype)

        # ------------- adjacency MLP: (Bt, N*L) -> (Bt, E*NNp) ---------------
        a = jnp.dot(z_a_ref[...], wa1[...], preferred_element_type=f32) + ba1[...]
        a = _leaky_relu(a).astype(cd)
        a = jnp.dot(a, wa2[...], preferred_element_type=f32) + ba2[...]
        a = _leaky_relu(a).astype(cd)
        # wa3/ba3 are pre-symmetrized + lane-padded in prepare_decoder_params,
        # so this matmul already yields (A + A^T)/2 over each (N, N) block.
        adj_logits = jnp.dot(a, wa3[...], preferred_element_type=f32) + ba3[...]

        if hard:
            va = adj_logits + g_adj_ref[...]
            # max over the edge-type axis via 128-aligned static lane slices.
            m = va[:, 0:NNp]
            for e in range(1, E):
                m = jnp.maximum(m, va[:, e * NNp:(e + 1) * NNp])
            pieces = []
            taken = jnp.zeros_like(m)
            for e in range(E):
                v_e = va[:, e * NNp:(e + 1) * NNp]
                hit = jnp.logical_and(v_e == m, taken == 0.0)  # first-max wins
                one = jnp.where(hit, 1.0, 0.0)
                taken = taken + one
                pieces.append(one)
            adj_ref[...] = jnp.concatenate(pieces, axis=-1).astype(adj_ref.dtype)
        else:
            adj_ref[...] = adj_logits.astype(adj_ref.dtype)

    return kernel


def init_params(key, latent_size, num_nodes, num_edge_types, node_feat_size):
    L, N, E, F = latent_size, num_nodes, num_edge_types, node_feat_size
    NL, ENN = N * L, E * N * N
    ks = jax.random.split(key, 6)

    def linear(k, fan_in, fan_out):
        bound = 1.0 / math.sqrt(fan_in)
        kw, kb = jax.random.split(k)
        W = jax.random.uniform(kw, (fan_in, fan_out), jnp.float32, -bound, bound)
        b = jax.random.uniform(kb, (1, fan_out), jnp.float32, -bound, bound)
        return W, b

    W1, b1 = linear(ks[0], L, L)
    W2, b2 = linear(ks[1], L, 2 * F)
    W3, b3 = linear(ks[2], 2 * F, F)
    Wa1, ba1 = linear(ks[3], NL, NL)
    Wa2, ba2 = linear(ks[4], NL, ENN)
    Wa3, ba3 = linear(ks[5], ENN, ENN)
    return dict(W1=W1, b1=b1, W2=W2, b2=b2, W3=W3, b3=b3,
                Wa1=Wa1, ba1=ba1, Wa2=Wa2, ba2=ba2, Wa3=Wa3, ba3=ba3,
                latent_size=L, num_nodes=N, num_edge_types=E,
                node_feat_size=F)


def prepare_decoder_params(params, compute_dtype=jnp.bfloat16):
    """One-time (per weight update) preparation: symmetrization fold, lane
    padding of the output heads and compute-dtype casts."""
    L = params["latent_size"]; N = params["num_nodes"]
    E = params["num_edge_types"]; F = params["node_feat_size"]
    NN, ENN = N * N, E * N * N
    Fp = _round_up(F, 128)
    NNp = _round_up(NN, 128)

    # Fold (A + A^T)/2 into the final adj Linear (linear in its output).
    idx = jnp.arange(ENN)
    e_idx = idx // NN
    r_idx = (idx % NN) // N
    c_idx = idx % N
    perm = e_idx * NN + c_idx * N + r_idx
    Wa3_sym = 0.5 * (params["Wa3"] + params["Wa3"][:, perm])
    ba3_sym = 0.5 * (params["ba3"] + params["ba3"][:, perm])

    # Node head: pad output columns to a full 128-lane width; padded lanes
    # get zero weights and -1e30 bias so they never win the hard argmax.
    W3p = jnp.zeros((2 * F, Fp), jnp.float32).at[:, :F].set(params["W3"])
    b3p = jnp.full((1, Fp), NEG_BIG, jnp.float32).at[:, :F].set(params["b3"])

    # Adjacency head: pad each per-edge-type (N*N) column block up to NNp so
    # every per-edge slice / store in the kernel is lane-aligned.
    Wa3p = (jnp.zeros((ENN, E, NNp), jnp.float32)
            .at[:, :, :NN].set(Wa3_sym.reshape(ENN, E, NN))
            .reshape(ENN, E * NNp))
    ba3p = (jnp.zeros((1, E, NNp), jnp.float32)
            .at[:, :, :NN].set(ba3_sym.reshape(1, E, NN))
            .reshape(1, E * NNp))

    cd = compute_dtype
    return dict(
        W1=params["W1"].astype(cd), b1=params["b1"],
        W2=params["W2"].astype(cd), b2=params["b2"],
        W3=W3p.astype(cd), b3=b3p,
        Wa1=params["Wa1"].astype(cd), ba1=params["ba1"],
        Wa2=params["Wa2"].astype(cd), ba2=params["ba2"],
        Wa3=Wa3p.astype(cd), ba3=ba3p,
        latent_size=L, num_nodes=N, num_edge_types=E, node_feat_size=F,
        feat_pad=Fp, nn_pad=NNp, compute_dtype=cd,
    )


def latent_decoder_forward(prep, z, g_feat=None, g_adj=None,
                           gumbel_softmax=True, block_batch=None):
    L = prep["latent_size"]; N = prep["num_nodes"]
    E = prep["num_edge_types"]; F = prep["node_feat_size"]
    Fp = prep["feat_pad"]; NNp = prep["nn_pad"]; cd = prep["compute_dtype"]
    B = z.shape[0]
    NN, NL, ENN = N * N, N * L, E * N * N

    z_n = z.reshape(B * N, L).astype(cd)
    z_a = z.reshape(B, NL).astype(cd)

    # ----- batch tile (multiple of 8 sublanes, or the full batch) -----------
    if block_batch is not None and B % block_batch == 0 and \
            (block_batch == B or block_batch % 8 == 0):
        Bt = block_batch
    else:
        Bt = _pick_block_batch(B, N)
    nb = B // Bt

    idx_act = lambda i: (i, 0)
    idx_const = lambda i: (0, 0)

    weights = (prep["W1"], prep["b1"], prep["W2"], prep["b2"],
               prep["W3"], prep["b3"],
               prep["Wa1"], prep["ba1"], prep["Wa2"], prep["ba2"],
               prep["Wa3"], prep["ba3"])

    operands = [z_n, z_a]
    in_specs = [pl.BlockSpec((Bt * N, L), idx_act),
                pl.BlockSpec((Bt, NL), idx_act)]

    if gumbel_softmax:
        # TODO(synk): F.gumbel_softmax samples its own noise; here the noise
        # is supplied by the caller for determinism.
        gf = g_feat.reshape(B * N, F).astype(jnp.float32)
        gf = jnp.pad(gf, ((0, 0), (0, Fp - F)))
        ga = g_adj.reshape(B, E, NN).astype(jnp.float32)
        ga = jnp.pad(ga, ((0, 0), (0, 0), (0, NNp - NN))).reshape(B, E * NNp)
        operands += [gf, ga]
        in_specs += [pl.BlockSpec((Bt * N, Fp), idx_act),
                     pl.BlockSpec((Bt, E * NNp), idx_act)]

    operands += list(weights)
    in_specs += [pl.BlockSpec(w.shape, idx_const) for w in weights]

    out_shape = (jax.ShapeDtypeStruct((B * N, Fp), jnp.float32),
                 jax.ShapeDtypeStruct((B, E * NNp), jnp.float32))
    out_specs = (pl.BlockSpec((Bt * N, Fp), idx_act),
                 pl.BlockSpec((Bt, E * NNp), idx_act))

    kernel = _make_kernel(E, NNp, gumbel_softmax)

    flops = int(2 * (B * N * (L * L + L * 2 * F + 2 * F * F)
                     + B * (NL * NL + NL * ENN + ENN * ENN)))
    bytes_accessed = int(sum(x.size * x.dtype.itemsize for x in operands)
                         + (B * N * Fp + B * E * NNp) * 4)

    # VMEM budget: weights single-buffered + double-buffered activation /
    # output blocks, with headroom; honors the small scoped default on v5e.
    weight_bytes = sum(int(w.size) * w.dtype.itemsize for w in weights)
    act_block_bytes = ((Bt * N * L + Bt * NL) * jnp.dtype(cd).itemsize
                       + (Bt * N * Fp + Bt * E * NNp) * 4)
    if gumbel_softmax:
        act_block_bytes += (Bt * N * Fp + Bt * E * NNp) * 4
    vmem_limit = int(min(max(weight_bytes + 2 * act_block_bytes + (2 << 20),
                             32 << 20), 60 << 20))

    feat_p, adj_p = pl.pallas_call(
        kernel,
        grid=(nb,),
        in_specs=in_specs,
        out_specs=out_specs,
        out_shape=out_shape,
        compiler_params=pltpu.CompilerParams(
            dimension_semantics=("parallel",),
            vmem_limit_bytes=vmem_limit),
        cost_estimate=pl.CostEstimate(flops=flops, transcendentals=0,
                                      bytes_accessed=bytes_accessed),
    )(*operands)

    node_features = feat_p[:, :F].reshape(B, N, F)
    adj_matrices = adj_p.reshape(B, E, NNp)[:, :, :NN].reshape(B, E, N, N)
    return node_features, adj_matrices


# ---------------------------------------------------------------------------
# Pure-JAX references
# ---------------------------------------------------------------------------
def reference_forward(params, z, g_feat, g_adj, gumbel_softmax=True):
    """Mirrors the PyTorch forward (explicit transpose, plain f32)."""
    B, N, L = z.shape
    E = params["num_edge_types"]; F = params["node_feat_size"]
    z_n = z.reshape(B * N, L).astype(jnp.float32)
    z_a = z.reshape(B, N * L).astype(jnp.float32)

    h = _leaky_relu(z_n @ params["W1"] + params["b1"])
    h = _leaky_relu(h @ params["W2"] + params["b2"])
    feat = (h @ params["W3"] + params["b3"]).reshape(B, N, F)
    if gumbel_softmax:
        feat = jax.nn.one_hot(jnp.argmax(feat + g_feat, axis=-1), F,
                              dtype=jnp.float32)

    a = _leaky_relu(z_a @ params["Wa1"] + params["ba1"])
    a = _leaky_relu(a @ params["Wa2"] + params["ba2"])
    adj = (a @ params["Wa3"] + params["ba3"]).reshape(B, E, N, N)
    adj = 0.5 * (adj + jnp.swapaxes(adj, 3, 2))
    if gumbel_softmax:
        adj = jax.nn.one_hot(jnp.argmax(adj + g_adj, axis=1), E, axis=1,
                             dtype=jnp.float32)
    return feat, adj


def reference_prepared(prep, z, g_feat, g_adj, gumbel_softmax=True):
    """Mirrors the kernel math (prepared weights / padded heads / dtype casts)."""
    L = prep["latent_size"]; N = prep["num_nodes"]
    E = prep["num_edge_types"]; F = prep["node_feat_size"]
    NNp = prep["nn_pad"]; cd = prep["compute_dtype"]
    B = z.shape[0]; NN = N * N
    f32 = jnp.float32

    h = z.reshape(B * N, L).astype(cd)
    h = jnp.dot(h, prep["W1"], preferred_element_type=f32) + prep["b1"]
    h = _leaky_relu(h).astype(cd)
    h = jnp.dot(h, prep["W2"], preferred_element_type=f32) + prep["b2"]
    h = _leaky_relu(h).astype(cd)
    feat = (jnp.dot(h, prep["W3"], preferred_element_type=f32)
            + prep["b3"])[:, :F].reshape(B, N, F)
    if gumbel_softmax:
        feat = jax.nn.one_hot(jnp.argmax(feat + g_feat, axis=-1), F, dtype=f32)

    a = z.reshape(B, N * L).astype(cd)
    a = jnp.dot(a, prep["Wa1"], preferred_element_type=f32) + prep["ba1"]
    a = _leaky_relu(a).astype(cd)
    a = jnp.dot(a, prep["Wa2"], preferred_element_type=f32) + prep["ba2"]
    a = _leaky_relu(a).astype(cd)
    adj = jnp.dot(a, prep["Wa3"], preferred_element_type=f32) + prep["ba3"]
    adj = adj.reshape(B, E, NNp)[:, :, :NN].reshape(B, E, N, N)
    if gumbel_softmax:
        adj = jax.nn.one_hot(jnp.argmax(adj + g_adj, axis=1), E, axis=1,
                             dtype=f32)
    return feat, adj


if __name__ == "__main__":
    # TODO(synk): only the forward value of hard gumbel-softmax is implemented;
    # the straight-through gradient needs a custom_vjp before training use.
    latent_size, num_nodes, num_edge_types, node_feat_size = 8, 4, 3, 4
    B = 16

    key = jax.random.PRNGKey(0)
    kp, kz, kgf, kga = jax.random.split(key, 4)
    params = init_params(kp, latent_size, num_nodes, num_edge_types,
                         node_feat_size)
    z = jax.random.normal(kz, (B, num_nodes, latent_size), jnp.float32)
    g_feat = jax.random.gumbel(kgf, (B, num_nodes, node_feat_size), jnp.float32)
    g_adj = jax.random.gumbel(kga, (B, num_edge_types, num_nodes, num_nodes),
                              jnp.float32)

    # --- bf16 weights (production path), 2 batch blocks on the grid ---------
    prep_bf16 = prepare_decoder_params(params, compute_dtype=jnp.bfloat16)
    feat, adj = latent_decoder_forward(prep_bf16, z, g_feat, g_adj,
                                       gumbel_softmax=True, block_batch=8)
    feat, adj = jax.block_until_ready((feat, adj))
    rf, ra = reference_prepared(prep_bf16, z, g_feat, g_adj, gumbel_softmax=True)
    assert feat.shape == (B, num_nodes, node_feat_size)
    assert adj.shape == (B, num_edge_types, num_nodes, num_nodes)
    assert jnp.allclose(feat, rf, atol=1e-6)
    assert jnp.allclose(adj, ra, atol=1e-6)

    feat_s, adj_s = latent_decoder_forward(prep_bf16, z, g_feat, g_adj,
                                           gumbel_softmax=False, block_batch=8)
    feat_s, adj_s = jax.block_until_ready((feat_s, adj_s))
    rfs, ras = reference_prepared(prep_bf16, z, g_feat, g_adj,
                                  gumbel_softmax=False)
    assert jnp.allclose(feat_s, rfs, atol=1e-4, rtol=1e-4)
    assert jnp.allclose(adj_s, ras, atol=1e-4, rtol=1e-4)

    # --- f32 weights: validate the symmetrization fold / padded layout
    # --- against the plain PyTorch-style reference --------------------------
    prep_f32 = prepare_decoder_params(params, compute_dtype=jnp.float32)
    feat32, adj32 = latent_decoder_forward(prep_f32, z, g_feat, g_adj,
                                           gumbel_softmax=True)
    feat32, adj32 = jax.block_until_ready((feat32, adj32))
    rf32, ra32 = reference_forward(params, z, g_feat, g_adj, gumbel_softmax=True)
    assert jnp.allclose(feat32, rf32, atol=1e-5)
    assert jnp.allclose(adj32, ra32, atol=1e-5)

    feat32s, adj32s = latent_decoder_forward(prep_f32, z, g_feat, g_adj,
                                             gumbel_softmax=False)
    feat32s, adj32s = jax.block_until_ready((feat32s, adj32s))
    rf32s, ra32s = reference_forward(params, z, g_feat, g_adj,
                                     gumbel_softmax=False)
    assert jnp.allclose(feat32s, rf32s, atol=1e-4, rtol=1e-4)
    assert jnp.allclose(adj32s, ra32s, atol=1e-4, rtol=1e-4)

    print("KERNEL_OK")
</pallas_src>

<mosaic_0001>
module attributes {stable_mosaic.version = 11 : i64} {
  func.func @kernel(%arg0: i32, %arg1: memref<32x8xbf16, #tpu.memory_space<vmem>>, %arg2: memref<8x32xbf16, #tpu.memory_space<vmem>>, %arg3: memref<32x128xf32, #tpu.memory_space<vmem>>, %arg4: memref<8x384xf32, #tpu.memory_space<vmem>>, %arg5: memref<8x8xbf16, #tpu.memory_space<vmem>>, %arg6: memref<1x8xf32, #tpu.memory_space<vmem>>, %arg7: memref<8x8xbf16, #tpu.memory_space<vmem>>, %arg8: memref<1x8xf32, #tpu.memory_space<vmem>>, %arg9: memref<8x128xbf16, #tpu.memory_space<vmem>>, %arg10: memref<1x128xf32, #tpu.memory_space<vmem>>, %arg11: memref<32x32xbf16, #tpu.memory_space<vmem>>, %arg12: memref<1x32xf32, #tpu.memory_space<vmem>>, %arg13: memref<32x48xbf16, #tpu.memory_space<vmem>>, %arg14: memref<1x48xf32, #tpu.memory_space<vmem>>, %arg15: memref<48x384xbf16, #tpu.memory_space<vmem>>, %arg16: memref<1x384xf32, #tpu.memory_space<vmem>>, %arg17: memref<32x128xf32, #tpu.memory_space<vmem>>, %arg18: memref<8x384xf32, #tpu.memory_space<vmem>>) attributes {dimension_semantics = [#tpu.dimension_semantics<parallel>], iteration_bounds = array<i64: 2>, scalar_prefetch = 0 : i64, scratch_operands = 0 : i64, tpu.core_type = #tpu.core_type<tc>, window_params = [{transform_indices = @transform_0, window_bounds = array<i64: 32, 8>}, {transform_indices = @transform_1, window_bounds = array<i64: 8, 32>}, {transform_indices = @transform_2, window_bounds = array<i64: 32, 128>}, {transform_indices = @transform_3, window_bounds = array<i64: 8, 384>}, {pipeline_mode = #tpu.pipeline_mode<synchronous>, transform_indices = @transform_4, window_bounds = array<i64: 8, 8>}, {pipeline_mode = #tpu.pipeline_mode<synchronous>, transform_indices = @transform_5, window_bounds = array<i64: 1, 8>}, {pipeline_mode = #tpu.pipeline_mode<synchronous>, transform_indices = @transform_6, window_bounds = array<i64: 8, 8>}, {pipeline_mode = #tpu.pipeline_mode<synchronous>, transform_indices = @transform_7, window_bounds = array<i64: 1, 8>}, {pipeline_mode = #tpu.pipeline_mode<synchronous>, transform_indices = @transform_8, window_bounds = array<i64: 8, 128>}, {pipeline_mode = #tpu.pipeline_mode<synchronous>, transform_indices = @transform_9, window_bounds = array<i64: 1, 128>}, {pipeline_mode = #tpu.pipeline_mode<synchronous>, transform_indices = @transform_10, window_bounds = array<i64: 32, 32>}, {pipeline_mode = #tpu.pipeline_mode<synchronous>, transform_indices = @transform_11, window_bounds = array<i64: 1, 32>}, {pipeline_mode = #tpu.pipeline_mode<synchronous>, transform_indices = @transform_12, window_bounds = array<i64: 32, 48>}, {pipeline_mode = #tpu.pipeline_mode<synchronous>, transform_indices = @transform_13, window_bounds = array<i64: 1, 48>}, {pipeline_mode = #tpu.pipeline_mode<synchronous>, transform_indices = @transform_14, window_bounds = array<i64: 48, 384>}, {pipeline_mode = #tpu.pipeline_mode<synchronous>, transform_indices = @transform_15, window_bounds = array<i64: 1, 384>}, {transform_indices = @transform_16, window_bounds = array<i64: 32, 128>}, {transform_indices = @transform_17, window_bounds = array<i64: 8, 384>}]} {
    %c0 = arith.constant 0 : index
    %c0_0 = arith.constant 0 : index
    %0 = vector.load %arg1[%c0, %c0_0] : memref<32x8xbf16, #tpu.memory_space<vmem>>, vector<32x8xbf16>
    %c0_1 = arith.constant 0 : index
    %c0_2 = arith.constant 0 : index
    %1 = vector.load %arg5[%c0_1, %c0_2] : memref<8x8xbf16, #tpu.memory_space<vmem>>, vector<8x8xbf16>
    %cst = arith.constant dense<0.000000e+00> : vector<32x8xf32>
    %2 = tpu.matmul %0, %1, %cst {dimension_numbers = #tpu.dot_dimension_numbers<[1], [0], [0], [1], [0, 0, 1, 1], [], []>} : vector<32x8xbf16>, vector<8x8xbf16>, vector<32x8xf32> -> vector<32x8xf32>
    %c0_3 = arith.constant 0 : index
    %c0_4 = arith.constant 0 : index
    %3 = vector.load %arg6[%c0_3, %c0_4] : memref<1x8xf32, #tpu.memory_space<vmem>>, vector<1x8xf32>
    %4 = vector.broadcast %3 : vector<1x8xf32> to vector<32x8xf32>
    %5 = arith.addf %2, %4 : vector<32x8xf32>
    %cst_5 = arith.constant 0.000000e+00 : f32
    %6 = vector.broadcast %cst_5 : f32 to vector<32x8xf32>
    %7 = arith.cmpf ogt, %5, %6 : vector<32x8xf32>
    %cst_6 = arith.constant 2.000000e-02 : f32
    %8 = vector.broadcast %cst_6 : f32 to vector<32x8xf32>
    %9 = arith.mulf %8, %5 : vector<32x8xf32>
    %10 = arith.select %7, %5, %9 : vector<32x8xi1>, vector<32x8xf32>
    %11 = arith.truncf %10 : vector<32x8xf32> to vector<32x8xbf16>
    %c0_7 = arith.constant 0 : index
    %c0_8 = arith.constant 0 : index
    %12 = vector.load %arg7[%c0_7, %c0_8] : memref<8x8xbf16, #tpu.memory_space<vmem>>, vector<8x8xbf16>
    %cst_9 = arith.constant dense<0.000000e+00> : vector<32x8xf32>
    %13 = tpu.matmul %11, %12, %cst_9 {dimension_numbers = #tpu.dot_dimension_numbers<[1], [0], [0], [1], [0, 0, 1, 1], [], []>} : vector<32x8xbf16>, vector<8x8xbf16>, vector<32x8xf32> -> vector<32x8xf32>
    %c0_10 = arith.constant 0 : index
    %c0_11 = arith.constant 0 : index
    %14 = vector.load %arg8[%c0_10, %c0_11] : memref<1x8xf32, #tpu.memory_space<vmem>>, vector<1x8xf32>
    %15 = vector.broadcast %14 : vector<1x8xf32> to vector<32x8xf32>
    %16 = arith.addf %13, %15 : vector<32x8xf32>
    %cst_12 = arith.constant 0.000000e+00 : f32
    %17 = vector.broadcast %cst_12 : f32 to vector<32x8xf32>
    %18 = arith.cmpf ogt, %16, %17 : vector<32x8xf32>
    %cst_13 = arith.constant 2.000000e-02 : f32
    %19 = vector.broadcast %cst_13 : f32 to vector<32x8xf32>
    %20 = arith.mulf %19, %16 : vector<32x8xf32>
    %21 = arith.select %18, %16, %20 : vector<32x8xi1>, vector<32x8xf32>
    %22 = arith.truncf %21 : vector<32x8xf32> to vector<32x8xbf16>
    %c0_14 = arith.constant 0 : index
    %c0_15 = arith.constant 0 : index
    %23 = vector.load %arg9[%c0_14, %c0_15] : memref<8x128xbf16, #tpu.memory_space<vmem>>, vector<8x128xbf16>
    %cst_16 = arith.constant dense<0.000000e+00> : vector<32x128xf32>
    %24 = tpu.matmul %22, %23, %cst_16 {dimension_numbers = #tpu.dot_dimension_numbers<[1], [0], [0], [1], [0, 0, 1, 1], [], []>} : vector<32x8xbf16>, vector<8x128xbf16>, vector<32x128xf32> -> vector<32x128xf32>
    %c0_17 = arith.constant 0 : index
    %c0_18 = arith.constant 0 : index
    %25 = vector.load %arg10[%c0_17, %c0_18] : memref<1x128xf32, #tpu.memory_space<vmem>>, vector<1x128xf32>
    %26 = vector.broadcast %25 : vector<1x128xf32> to vector<32x128xf32>
    %27 = arith.addf %24, %26 : vector<32x128xf32>
    %c0_19 = arith.constant 0 : index
    %c0_20 = arith.constant 0 : index
    %28 = vector.load %arg3[%c0_19, %c0_20] : memref<32x128xf32, #tpu.memory_space<vmem>>, vector<32x128xf32>
    %29 = arith.addf %27, %28 : vector<32x128xf32>
    %cst_21 = arith.constant dense<0xFF800000> : vector<32xf32>
    %30 = vector.multi_reduction <maximumf>, %29, %cst_21 [1] : vector<32x128xf32> to vector<32xf32>
    %31 = vector.shape_cast %30 : vector<32xf32> to vector<32x1xf32>
    %32 = tpu.iota {dimensions = array<i32: 1>} : vector<32x128xi32>
    %33 = vector.broadcast %31 : vector<32x1xf32> to vector<32x128xf32>
    %34 = arith.cmpf oeq, %29, %33 : vector<32x128xf32>
    %c128_i32 = arith.constant 128 : i32
    %35 = vector.broadcast %c128_i32 : i32 to vector<32x128xi32>
    %36 = arith.select %34, %32, %35 : vector<32x128xi1>, vector<32x128xi32>
    %cst_22 = arith.constant dense<2147483647> : vector<32xi32>
    %37 = vector.multi_reduction <minsi>, %36, %cst_22 [1] : vector<32x128xi32> to vector<32xi32>
    %38 = vector.shape_cast %37 : vector<32xi32> to vector<32x1xi32>
    %39 = vector.broadcast %38 : vector<32x1xi32> to vector<32x128xi32>
    %40 = arith.cmpi eq, %32, %39 : vector<32x128xi32>
    %41 = arith.extui %40 : vector<32x128xi1> to vector<32x128xi32>
    %42 = arith.sitofp %41 : vector<32x128xi32> to vector<32x128xf32>
    %c0_23 = arith.constant 0 : index
    %c0_24 = arith.constant 0 : index
    %43 = vector.load %arg17[%c0_23, %c0_24] : memref<32x128xf32, #tpu.memory_space<vmem>>, vector<32x128xf32>
    tpu.vector_store %arg17[%c0_23, %c0_24], %42 {strides = array<i32>} : memref<32x128xf32, #tpu.memory_space<vmem>>, vector<32x128xf32>,
    %c0_25 = arith.constant 0 : index
    %c0_26 = arith.constant 0 : index
    %44 = vector.load %arg2[%c0_25, %c0_26] : memref<8x32xbf16, #tpu.memory_space<vmem>>, vector<8x32xbf16>
    %c0_27 = arith.constant 0 : index
    %c0_28 = arith.constant 0 : index
    %45 = vector.load %arg11[%c0_27, %c0_28] : memref<32x32xbf16, #tpu.memory_space<vmem>>, vector<32x32xbf16>
    %cst_29 = arith.constant dense<0.000000e+00> : vector<8x32xf32>
    %46 = tpu.matmul %44, %45, %cst_29 {dimension_numbers = #tpu.dot_dimension_numbers<[1], [0], [0], [1], [0, 0, 1, 1], [], []>} : vector<8x32xbf16>, vector<32x32xbf16>, vector<8x32xf32> -> vector<8x32xf32>
    %c0_30 = arith.constant 0 : index
    %c0_31 = arith.constant 0 : index
    %47 = vector.load %arg12[%c0_30, %c0_31] : memref<1x32xf32, #tpu.memory_space<vmem>>, vector<1x32xf32>
    %48 = vector.broadcast %47 : vector<1x32xf32> to vector<8x32xf32>
    %49 = arith.addf %46, %48 : vector<8x32xf32>
    %cst_32 = arith.constant 0.000000e+00 : f32
    %50 = vector.broadcast %cst_32 : f32 to vector<8x32xf32>
    %51 = arith.cmpf ogt, %49, %50 : vector<8x32xf32>
    %cst_33 = arith.constant 2.000000e-02 : f32
    %52 = vector.broadcast %cst_33 : f32 to vector<8x32xf32>
    %53 = arith.mulf %52, %49 : vector<8x32xf32>
    %54 = arith.select %51, %49, %53 : vector<8x32xi1>, vector<8x32xf32>
    %55 = arith.truncf %54 : vector<8x32xf32> to vector<8x32xbf16>
    %c0_34 = arith.constant 0 : index
    %c0_35 = arith.constant 0 : index
    %56 = vector.load %arg13[%c0_34, %c0_35] : memref<32x48xbf16, #tpu.memory_space<vmem>>, vector<32x48xbf16>
    %cst_36 = arith.constant dense<0.000000e+00> : vector<8x48xf32>
    %57 = tpu.matmul %55, %56, %cst_36 {dimension_numbers = #tpu.dot_dimension_numbers<[1], [0], [0], [1], [0, 0, 1, 1], [], []>} : vector<8x32xbf16>, vector<32x48xbf16>, vector<8x48xf32> -> vector<8x48xf32>
    %c0_37 = arith.constant 0 : index
    %c0_38 = arith.constant 0 : index
    %58 = vector.load %arg14[%c0_37, %c0_38] : memref<1x48xf32, #tpu.memory_space<vmem>>, vector<1x48xf32>
    %59 = vector.broadcast %58 : vector<1x48xf32> to vector<8x48xf32>
    %60 = arith.addf %57, %59 : vector<8x48xf32>
    %cst_39 = arith.constant 0.000000e+00 : f32
    %61 = vector.broadcast %cst_39 : f32 to vector<8x48xf32>
    %62 = arith.cmpf ogt, %60, %61 : vector<8x48xf32>
    %cst_40 = arith.constant 2.000000e-02 : f32
    %63 = vector.broadcast %cst_40 : f32 to vector<8x48xf32>
    %64 = arith.mulf %63, %60 : vector<8x48xf32>
    %65 = arith.select %62, %60, %64 : vector<8x48xi1>, vector<8x48xf32>
    %66 = arith.truncf %65 : vector<8x48xf32> to vector<8x48xbf16>
    %c0_41 = arith.constant 0 : index
    %c0_42 = arith.constant 0 : index
    %67 = vector.load %arg15[%c0_41, %c0_42] : memref<48x384xbf16, #tpu.memory_space<vmem>>, vector<48x384xbf16>
    %cst_43 = arith.constant dense<0.000000e+00> : vector<8x384xf32>
    %68 = tpu.matmul %66, %67, %cst_43 {dimension_numbers = #tpu.dot_dimension_numbers<[1], [0], [0], [1], [0, 0, 1, 1], [], []>} : vector<8x48xbf16>, vector<48x384xbf16>, vector<8x384xf32> -> vector<8x384xf32>
    %c0_44 = arith.constant 0 : index
    %c0_45 = arith.constant 0 : index
    %69 = vector.load %arg16[%c0_44, %c0_45] : memref<1x384xf32, #tpu.memory_space<vmem>>, vector<1x384xf32>
    %70 = vector.broadcast %69 : vector<1x384xf32> to vector<8x384xf32>
    %71 = arith.addf %68, %70 : vector<8x384xf32>
    %c0_46 = arith.constant 0 : index
    %c0_47 = arith.constant 0 : index
    %72 = vector.load %arg4[%c0_46, %c0_47] : memref<8x384xf32, #tpu.memory_space<vmem>>, vector<8x384xf32>
    %73 = arith.addf %71, %72 : vector<8x384xf32>
    %74 = vector.extract_strided_slice %73 {offsets = [0, 0], sizes = [8, 128], strides = [1, 1]} : vector<8x384xf32> to vector<8x128xf32>
    %75 = vector.extract_strided_slice %73 {offsets = [0, 128], sizes = [8, 128], strides = [1, 1]} : vector<8x384xf32> to vector<8x128xf32>
    %76 = arith.maximumf %74, %75 : vector<8x128xf32>
    %77 = vector.extract_strided_slice %73 {offsets = [0, 256], sizes = [8, 128], strides = [1, 1]} : vector<8x384xf32> to vector<8x128xf32>
    %78 = arith.maximumf %76, %77 : vector<8x128xf32>
    %cst_48 = arith.constant 0.000000e+00 : f32
    %79 = vector.broadcast %cst_48 : f32 to vector<8x128xf32>
    %80 = vector.extract_strided_slice %73 {offsets = [0, 0], sizes = [8, 128], strides = [1, 1]} : vector<8x384xf32> to vector<8x128xf32>
    %81 = arith.cmpf oeq, %80, %78 : vector<8x128xf32>
    %cst_49 = arith.constant 0.000000e+00 : f32
    %82 = vector.broadcast %cst_49 : f32 to vector<8x128xf32>
    %83 = arith.cmpf oeq, %79, %82 : vector<8x128xf32>
    %84 = arith.andi %81, %83 : vector<8x128xi1>
    %cst_50 = arith.constant 1.000000e+00 : f32
    %cst_51 = arith.constant 0.000000e+00 : f32
    %85 = vector.broadcast %cst_50 : f32 to vector<8x128xf32>
    %86 = vector.broadcast %cst_51 : f32 to vector<8x128xf32>
    %87 = arith.select %84, %85, %86 : vector<8x128xi1>, vector<8x128xf32>
    %88 = arith.addf %79, %87 : vector<8x128xf32>
    %89 = vector.extract_strided_slice %73 {offsets = [0, 128], sizes = [8, 128], strides = [1, 1]} : vector<8x384xf32> to vector<8x128xf32>
    %90 = arith.cmpf oeq, %89, %78 : vector<8x128xf32>
    %cst_52 = arith.constant 0.000000e+00 : f32
    %91 = vector.broadcast %cst_52 : f32 to vector<8x128xf32>
    %92 = arith.cmpf oeq, %88, %91 : vector<8x128xf32>
    %93 = arith.andi %90, %92 : vector<8x128xi1>
    %cst_53 = arith.constant 1.000000e+00 : f32
    %cst_54 = arith.constant 0.000000e+00 : f32
    %94 = vector.broadcast %cst_53 : f32 to vector<8x128xf32>
    %95 = vector.broadcast %cst_54 : f32 to vector<8x128xf32>
    %96 = arith.select %93, %94, %95 : vector<8x128xi1>, vector<8x128xf32>
    %97 = arith.addf %88, %96 : vector<8x128xf32>
    %98 = vector.extract_strided_slice %73 {offsets = [0, 256], sizes = [8, 128], strides = [1, 1]} : vector<8x384xf32> to vector<8x128xf32>
    %99 = arith.cmpf oeq, %98, %78 : vector<8x128xf32>
    %cst_55 = arith.constant 0.000000e+00 : f32
    %100 = vector.broadcast %cst_55 : f32 to vector<8x128xf32>
    %101 = arith.cmpf oeq, %97, %100 : vector<8x128xf32>
    %102 = arith.andi %99, %101 : vector<8x128xi1>
    %cst_56 = arith.constant 1.000000e+00 : f32
    %cst_57 = arith.constant 0.000000e+00 : f32
    %103 = vector.broadcast %cst_56 : f32 to vector<8x128xf32>
    %104 = vector.broadcast %cst_57 : f32 to vector<8x128xf32>
    %105 = arith.select %102, %103, %104 : vector<8x128xi1>, vector<8x128xf32>
    %106 = tpu.concatenate %87, %96, %105 in 1 : vector<8x128xf32>, vector<8x128xf32>, vector<8x128xf32> -> vector<8x384xf32>
    %c0_58 = arith.constant 0 : index
    %c0_59 = arith.constant 0 : index
    %107 = vector.load %arg18[%c0_58, %c0_59] : memref<8x384xf32, #tpu.memory_space<vmem>>, vector<8x384xf32>
    tpu.vector_store %arg18[%c0_58, %c0_59], %106 {strides = array<i32>} : memref<8x384xf32, #tpu.memory_space<vmem>>, vector<8x384xf32>,
    return
  }
  func.func @transform_0(%arg0: i32) -> (i32, i32) {
    %c0_i32 = arith.constant 0 : i32
    %c0_i32_0 = arith.constant 0 : i32
    return %arg0, %c0_i32 : i32, i32
  }
  func.func @transform_1(%arg0: i32) -> (i32, i32) {
    %c0_i32 = arith.constant 0 : i32
    %c0_i32_0 = arith.constant 0 : i32
    return %arg0, %c0_i32 : i32, i32
  }
  func.func @transform_2(%arg0: i32) -> (i32, i32) {
    %c0_i32 = arith.constant 0 : i32
    %c0_i32_0 = arith.constant 0 : i32
    return %arg0, %c0_i32 : i32, i32
  }
  func.func @transform_3(%arg0: i32) -> (i32, i32) {
    %c0_i32 = arith.constant 0 : i32
    %c0_i32_0 = arith.constant 0 : i32
    return %arg0, %c0_i32 : i32, i32
  }
  func.func @transform_4(%arg0: i32) -> (i32, i32) {
    %c0_i32 = arith.constant 0 : i32
    %c0_i32_0 = arith.constant 0 : i32
    %c0_i32_1 = arith.constant 0 : i32
    return %c0_i32, %c0_i32_0 : i32, i32
  }
  func.func @transform_5(%arg0: i32) -> (i32, i32) {
    %c0_i32 = arith.constant 0 : i32
    %c0_i32_0 = arith.constant 0 : i32
    %c0_i32_1 = arith.constant 0 : i32
    return %c0_i32, %c0_i32_0 : i32, i32
  }
  func.func @transform_6(%arg0: i32) -> (i32, i32) {
    %c0_i32 = arith.constant 0 : i32
    %c0_i32_0 = arith.constant 0 : i32
    %c0_i32_1 = arith.constant 0 : i32
    return %c0_i32, %c0_i32_0 : i32, i32
  }
  func.func @transform_7(%arg0: i32) -> (i32, i32) {
    %c0_i32 = arith.constant 0 : i32
    %c0_i32_0 = arith.constant 0 : i32
    %c0_i32_1 = arith.constant 0 : i32
    return %c0_i32, %c0_i32_0 : i32, i32
  }
  func.func @transform_8(%arg0: i32) -> (i32, i32) {
    %c0_i32 = arith.constant 0 : i32
    %c0_i32_0 = arith.constant 0 : i32
    %c0_i32_1 = arith.constant 0 : i32
    return %c0_i32, %c0_i32_0 : i32, i32
  }
  func.func @transform_9(%arg0: i32) -> (i32, i32) {
    %c0_i32 = arith.constant 0 : i32
    %c0_i32_0 = arith.constant 0 : i32
    %c0_i32_1 = arith.constant 0 : i32
    return %c0_i32, %c0_i32_0 : i32, i32
  }
  func.func @transform_10(%arg0: i32) -> (i32, i32) {
    %c0_i32 = arith.constant 0 : i32
    %c0_i32_0 = arith.constant 0 : i32
    %c0_i32_1 = arith.constant 0 : i32
    return %c0_i32, %c0_i32_0 : i32, i32
  }
  func.func @transform_11(%arg0: i32) -> (i32, i32) {
    %c0_i32 = arith.constant 0 : i32
    %c0_i32_0 = arith.constant 0 : i32
    %c0_i32_1 = arith.constant 0 : i32
    return %c0_i32, %c0_i32_0 : i32, i32
  }
  func.func @transform_12(%arg0: i32) -> (i32, i32) {
    %c0_i32 = arith.constant 0 : i32
    %c0_i32_0 = arith.constant 0 : i32
    %c0_i32_1 = arith.constant 0 : i32
    return %c0_i32, %c0_i32_0 : i32, i32
  }
  func.func @transform_13(%arg0: i32) -> (i32, i32) {
    %c0_i32 = arith.constant 0 : i32
    %c0_i32_0 = arith.constant 0 : i32
    %c0_i32_1 = arith.constant 0 : i32
    return %c0_i32, %c0_i32_0 : i32, i32
  }
  func.func @transform_14(%arg0: i32) -> (i32, i32) {
    %c0_i32 = arith.constant 0 : i32
    %c0_i32_0 = arith.constant 0 : i32
    %c0_i32_1 = arith.constant 0 : i32
    return %c0_i32, %c0_i32_0 : i32, i32
  }
  func.func @transform_15(%arg0: i32) -> (i32, i32) {
    %c0_i32 = arith.constant 0 : i32
    %c0_i32_0 = arith.constant 0 : i32
    %c0_i32_1 = arith.constant 0 : i32
    return %c0_i32, %c0_i32_0 : i32, i32
  }
  func.func @transform_16(%arg0: i32) -> (i32, i32) {
    %c0_i32 = arith.constant 0 : i32
    %c0_i32_0 = arith.constant 0 : i32
    return %arg0, %c0_i32 : i32, i32
  }
  func.func @transform_17(%arg0: i32) -> (i32, i32) {
    %c0_i32 = arith.constant 0 : i32
    %c0_i32_0 = arith.constant 0 : i32
    return %arg0, %c0_i32 : i32, i32
  }
}

</mosaic_0001>

<llo_original>
// kernel: tpu_custom_call.1
$region0: #{tpu_custom_call.1}
  #allocation0 [shape = 'u32[]', space=smem, size = 0x4, offset = 0x4, fixed_abs, tag = 'smem constant byte address 0x4 - core index']
  #allocation1 [shape = 'u32[144,128]{1,0:T(1,128)}', space=vmem, size = 0x12000, scoped, tag = 'internal scratch']
  %s0 = inlined_call_operand.vmem [shape: bf16[64,8], index: 0, kind: input, shape index: {}]
  %s1 = inlined_call_operand.hbm [shape: bf16[16,32], index: 1, kind: input, shape index: {}]
  %s2 = inlined_call_operand.hbm [shape: f32[64,128], index: 2, kind: input, shape index: {}]
  %s3 = inlined_call_operand.hbm [shape: f32[16,384], index: 3, kind: input, shape index: {}]
  %s4 = inlined_call_operand.hbm [shape: bf16[8,8], index: 4, kind: input, shape index: {}]
  %s5 = inlined_call_operand.hbm [shape: f32[1,8], index: 5, kind: input, shape index: {}]
  %s6 = inlined_call_operand.hbm [shape: bf16[8,8], index: 6, kind: input, shape index: {}]
  %s7 = inlined_call_operand.hbm [shape: f32[1,8], index: 7, kind: input, shape index: {}]
  %s8 = inlined_call_operand.hbm [shape: bf16[8,128], index: 8, kind: input, shape index: {}]
  %s9 = inlined_call_operand.hbm [shape: f32[1,128], index: 9, kind: input, shape index: {}]
  %s10 = inlined_call_operand.vmem [shape: bf16[32,32], index: 10, kind: input, shape index: {}]
  %s11 = inlined_call_operand.hbm [shape: f32[1,32], index: 11, kind: input, shape index: {}]
  %s12 = inlined_call_operand.hbm [shape: bf16[32,48], index: 12, kind: input, shape index: {}]
  %s13 = inlined_call_operand.hbm [shape: f32[1,48], index: 13, kind: input, shape index: {}]
  %s14 = inlined_call_operand.vmem [shape: bf16[48,384], index: 14, kind: input, shape index: {}]
  %s15 = inlined_call_operand.vmem [shape: f32[1,384], index: 15, kind: input, shape index: {}]
  %s16 = inlined_call_operand.hbm [shape: f32[64,128], index: 16, kind: output, shape index: {0}]
  %s17 = inlined_call_operand.hbm [shape: f32[16,384], index: 17, kind: output, shape index: {1}]
  %18 = xla_tuple %s16, %s17
  %s19 = sld [smem:[#allocation0]]
  $region153: #{tpu_custom_call.1} parent=0
    _
  %s21 = ssub.s32 1, %s19
  %s22 = scalar_select 0, %s21, %s19
  $region1: #{tpu_custom_call.1} parent=0
    #allocation2 [shape = 'u8[4096]{0}', space=vmem, size = 0x1000, scoped, tag = 'input window, operand 1']
    #allocation3 [shape = 's32[2]{0}', space=sflag, size = 0x8, scoped, tag = 'scoped memory for tpu_custom_call.1']
    #allocation4 [shape = 's32[2]{0}', space=sflag, size = 0x8, scoped, tag = 'scoped memory for tpu_custom_call.1']
    #allocation5 [shape = 'u8[32768]{0}', space=vmem, size = 0x8000, scoped, tag = 'input window, operand 2']
    #allocation6 [shape = 's32[2]{0}', space=sflag, size = 0x8, scoped, tag = 'scoped memory for tpu_custom_call.1']
    #allocation7 [shape = 'u8[24576]{0}', space=vmem, size = 0x6000, scoped, tag = 'input window, operand 3']
    #allocation8 [shape = 'u8[2048]{0}', space=vmem, size = 0x800, scoped, tag = 'input window, operand 4, single buffered']
    #allocation9 [shape = 's32[1]{0}', space=sflag, size = 0x4, scoped, tag = 'scoped memory for tpu_custom_call.1']
    #allocation10 [shape = 'u8[512]{0}', space=vmem, size = 0x400, scoped, tag = 'input window, operand 5, single buffered']
    #allocation11 [shape = 'u8[2048]{0}', space=vmem, size = 0x800, scoped, tag = 'input window, operand 6, single buffered']
    #allocation12 [shape = 's32[1]{0}', space=sflag, size = 0x4, scoped, tag = 'scoped memory for tpu_custom_call.1']
    #allocation13 [shape = 'u8[512]{0}', space=vmem, size = 0x400, scoped, tag = 'input window, operand 7, single buffered']
    #allocation14 [shape = 'u8[2048]{0}', space=vmem, size = 0x800, scoped, tag = 'input window, operand 8, single buffered']
    #allocation15 [shape = 's32[1]{0}', space=sflag, size = 0x4, scoped, tag = 'scoped memory for tpu_custom_call.1']
    #allocation16 [shape = 'u8[512]{0}', space=vmem, size = 0x400, scoped, tag = 'input window, operand 9, single buffered']
    #allocation17 [shape = 'u8[512]{0}', space=vmem, size = 0x400, scoped, tag = 'input window, operand 11, single buffered']
    #allocation18 [shape = 's32[1]{0}', space=sflag, size = 0x4, scoped, tag = 'scoped memory for tpu_custom_call.1']
    #allocation19 [shape = 'u8[8192]{0}', space=vmem, size = 0x2000, scoped, tag = 'input window, operand 12, single buffered']
    #allocation20 [shape = 'u8[512]{0}', space=vmem, size = 0x400, scoped, tag = 'input window, operand 13, single buffered']
    #allocation21 [shape = 's32[1]{0}', space=sflag, size = 0x4, scoped, tag = 'scoped memory for tpu_custom_call.1']
    #allocation22 [shape = 'u8[32768]{0}', space=vmem, size = 0x8000, scoped, tag = 'output window, operand 0']
    #allocation23 [shape = 'u8[24576]{0}', space=vmem, size = 0x6000, scoped, tag = 'output window, operand 1']
    #allocation24 [shape = 's32[2]{0}', space=sflag, size = 0x8, scoped, tag = 'scoped memory for tpu_custom_call.1']
    %23 = vsyncpa [#allocation3], 0
    %s24 = scalar_lea.sflag [#allocation3], 1
    %25 = vsyncpa %s24, 0
    %26 = vsyncpa [#allocation6], 0
    %s27 = scalar_lea.sflag [#allocation6], 1
    %28 = vsyncpa %s27, 0
    %29 = vsyncpa [#allocation9], 0
    %30 = vsyncpa [#allocation12], 0
    %31 = vsyncpa [#allocation15], 0
    %32 = vsyncpa [#allocation18], 0
    %33 = vsyncpa [#allocation21], 0
    %34 = vsyncpa [#allocation4], 0
    %s35 = scalar_lea.sflag [#allocation4], 1
    %36 = vsyncpa %s35, 0
    %37 = vsyncpa [#allocation24], 0
    %s38 = scalar_lea.sflag [#allocation24], 1
    %39 = vsyncpa %s38, 0
    loop: start=0, step=1, limit=4
    $region2: #{tpu_custom_call.1} parent=1 // loop_pre_header
      _
    $region3: #{tpu_custom_call.1} parent=1 // loop_header
      %s41 = sphi 0, %s45
      %p42 = scmp.ge.s32.totalorder %s41, 4
      %s51 = sphi 0, %s53
      %s54 = sphi 0, %s51
      %s55 = sphi 0, %s54
      %s71 = sphi 0, %s55
      %s77 = sphi 0, %s79
      %s80 = sphi 0, %s77
      %s81 = sphi 0, %s80
      %s97 = sphi 0, %s81
      %s103 = sphi 0, %s105
      %s106 = sphi 0, %s103
      %s107 = sphi 0, %s106
      %s123 = sphi 0, %s107
      %s129 = sphi 0, %s131
      %s132 = sphi 0, %s129
      %s133 = sphi 0, %s132
      %s149 = sphi 0, %s133
      %s153 = sphi 0, %s153
      %s155 = sphi 0, %s153
      %s156 = sphi 0, %s155
      %s170 = sphi 0, %s156
      %s174 = sphi 0, %s174
      %s176 = sphi 0, %s174
      %s177 = sphi 0, %s176
      %s191 = sphi 0, %s177
      %s195 = sphi 0, %s195
      %s197 = sphi 0, %s195
      %s198 = sphi 0, %s197
      %s212 = sphi 0, %s198
      %s216 = sphi 0, %s216
      %s218 = sphi 0, %s216
      %s219 = sphi 0, %s218
      %s233 = sphi 0, %s219
      %s237 = sphi 0, %s237
      %s239 = sphi 0, %s237
      %s240 = sphi 0, %s239
      %s254 = sphi 0, %s240
      %s258 = sphi 0, %s258
      %s260 = sphi 0, %s258
      %s261 = sphi 0, %s260
      %s275 = sphi 0, %s261
      %s279 = sphi 0, %s279
      %s281 = sphi 0, %s279
      %s282 = sphi 0, %s281
      %s296 = sphi 0, %s282
      %s300 = sphi 0, %s300
      %s302 = sphi 0, %s300
      %s303 = sphi 0, %s302
      %s317 = sphi 0, %s303
      %s321 = sphi 0, %s321
      %s323 = sphi 0, %s321
      %s324 = sphi 0, %s323
      %s338 = sphi 0, %s324
      %s342 = sphi 0, %s342
      %s344 = sphi 0, %s342
      %s345 = sphi 0, %s344
      %s359 = sphi 0, %s345
      %s363 = sphi 0, %s363
      %s365 = sphi 0, %s363
      %s366 = sphi 0, %s365
      %s380 = sphi 0, %s366
      %s384 = sphi 0, %s384
      %s386 = sphi 0, %s384
      %s387 = sphi 0, %s386
      %s401 = sphi 0, %s387
      %s407 = sphi 0, %s409
      %s410 = sphi 0, %s407
      %s411 = sphi 0, %s410
      %s427 = sphi 0, %s411
      %s433 = sphi 0, %s435
      %s436 = sphi 0, %s433
      %s437 = sphi 0, %s436
      %s453 = sphi 0, %s437
    $region4: #{tpu_custom_call.1} parent=1 // loop_header_branch
      %44 = sbr.rel (%p42) target = $region8
    $region5: #{tpu_custom_call.1} parent=1 // loop_body
      %s46 = ssub.s32 %s41, 1
      %s47 = ssub.s32 %s41, 2
      %s48 = sadd.s32 %s41, 1
      %s49 = ssub.s32 %s41, %s48
      %p50 = scmp.eq.s32.totalorder %s49, 0
      %s52 = sadd.s32 %s51, 1
      %s53 = scalar_select %p50, %s51, %s52
      %p56 = pneg %p50
      %p57 = scmp.eq.s32.totalorder %s41, 1
      %p58 = por %p56, %p57
      %p59 = scmp.ne.s32.totalorder %s51, %s54
      %p60 = scmp.eq.s32.totalorder %s41, 0
      %p61 = por %p59, %p60
      %p62 = scmp.ne.s32.totalorder %s51, %s54
      %p63 = scmp.eq.s32.totalorder %s46, 1
      %p64 = por %p62, %p63
      %p65 = scmp.ne.s32.totalorder %s54, %s55
      %p66 = scmp.eq.s32.totalorder %s46, 0
      %p67 = por %p65, %p66
      %p68 = scmp.ne.s32.totalorder %s54, %s55
      %p69 = scmp.eq.s32.totalorder %s47, 1
      %p70 = por %p68, %p69
      %p72 = scmp.ne.s32.totalorder %s55, %s71
      %p73 = scmp.eq.s32.totalorder %s47, 0
      %p74 = por %p72, %p73
      %s75 = ssub.s32 %s41, %s48
      %p76 = scmp.eq.s32.totalorder %s75, 0
      %s78 = sadd.s32 %s77, 1
      %s79 = scalar_select %p76, %s77, %s78
      %p82 = pneg %p76
      %p83 = scmp.eq.s32.totalorder %s41, 1
      %p84 = por %p82, %p83
      %p85 = scmp.ne.s32.totalorder %s77, %s80
      %p86 = scmp.eq.s32.totalorder %s41, 0
      %p87 = por %p85, %p86
      %p88 = scmp.ne.s32.totalorder %s77, %s80
      %p89 = scmp.eq.s32.totalorder %s46, 1
      %p90 = por %p88, %p89
      %p91 = scmp.ne.s32.totalorder %s80, %s81
      %p92 = scmp.eq.s32.totalorder %s46, 0
      %p93 = por %p91, %p92
      %p94 = scmp.ne.s32.totalorder %s80, %s81
      %p95 = scmp.eq.s32.totalorder %s47, 1
      %p96 = por %p94, %p95
      %p98 = scmp.ne.s32.totalorder %s81, %s97
      %p99 = scmp.eq.s32.totalorder %s47, 0
      %p100 = por %p98, %p99
      %s101 = ssub.s32 %s41, %s48
      %p102 = scmp.eq.s32.totalorder %s101, 0
      %s104 = sadd.s32 %s103, 1
      %s105 = scalar_select %p102, %s103, %s104
      %p108 = pneg %p102
      %p109 = scmp.eq.s32.totalorder %s41, 1
      %p110 = por %p108, %p109
      %p111 = scmp.ne.s32.totalorder %s103, %s106
      %p112 = scmp.eq.s32.totalorder %s41, 0
      %p113 = por %p111, %p112
      %p114 = scmp.ne.s32.totalorder %s103, %s106
      %p115 = scmp.eq.s32.totalorder %s46, 1
      %p116 = por %p114, %p115
      %p117 = scmp.ne.s32.totalorder %s106, %s107
      %p118 = scmp.eq.s32.totalorder %s46, 0
      %p119 = por %p117, %p118
      %p120 = scmp.ne.s32.totalorder %s106, %s107
      %p121 = scmp.eq.s32.totalorder %s47, 1
      %p122 = por %p120, %p121
      %p124 = scmp.ne.s32.totalorder %s107, %s123
      %p125 = scmp.eq.s32.totalorder %s47, 0
      %p126 = por %p124, %p125
      %s127 = ssub.s32 %s41, %s48
      %p128 = scmp.eq.s32.totalorder %s127, 0
      %s130 = sadd.s32 %s129, 1
      %s131 = scalar_select %p128, %s129, %s130
      %p134 = pneg %p128
      %p135 = scmp.eq.s32.totalorder %s41, 1
      %p136 = por %p134, %p135
      %p137 = scmp.ne.s32.totalorder %s129, %s132
      %p138 = scmp.eq.s32.totalorder %s41, 0
      %p139 = por %p137, %p138
      %p140 = scmp.ne.s32.totalorder %s129, %s132
      %p141 = scmp.eq.s32.totalorder %s46, 1
      %p142 = por %p140, %p141
      %p143 = scmp.ne.s32.totalorder %s132, %s133
      %p144 = scmp.eq.s32.totalorder %s46, 0
      %p145 = por %p143, %p144
      %p146 = scmp.ne.s32.totalorder %s132, %s133
      %p147 = scmp.eq.s32.totalorder %s47, 1
      %p148 = por %p146, %p147
      %p150 = scmp.ne.s32.totalorder %s133, %s149
      %p151 = scmp.eq.s32.totalorder %s47, 0
      %p152 = por %p150, %p151
      %s154 = sadd.s32 %s153, 1
      %p157 = scmp.eq.s32.totalorder %s41, 1
      %p158 = scmp.ne.s32.totalorder %s153, %s155
      %p159 = scmp.eq.s32.totalorder %s41, 0
      %p160 = por %p158, %p159
      %p161 = scmp.ne.s32.totalorder %s153, %s155
      %p162 = scmp.eq.s32.totalorder %s46, 1
      %p163 = por %p161, %p162
      %p164 = scmp.ne.s32.totalorder %s155, %s156
      %p165 = scmp.eq.s32.totalorder %s46, 0
      %p166 = por %p164, %p165
      %p167 = scmp.ne.s32.totalorder %s155, %s156
      %p168 = scmp.eq.s32.totalorder %s47, 1
      %p169 = por %p167, %p168
      %p171 = scmp.ne.s32.totalorder %s156, %s170
      %p172 = scmp.eq.s32.totalorder %s47, 0
      %p173 = por %p171, %p172
      %s175 = sadd.s32 %s174, 1
      %p178 = scmp.eq.s32.totalorder %s41, 1
      %p179 = scmp.ne.s32.totalorder %s174, %s176
      %p180 = scmp.eq.s32.totalorder %s41, 0
      %p181 = por %p179, %p180
      %p182 = scmp.ne.s32.totalorder %s174, %s176
      %p183 = scmp.eq.s32.totalorder %s46, 1
      %p184 = por %p182, %p183
      %p185 = scmp.ne.s32.totalorder %s176, %s177
      %p186 = scmp.eq.s32.totalorder %s46, 0
      %p187 = por %p185, %p186
      %p188 = scmp.ne.s32.totalorder %s176, %s177
      %p189 = scmp.eq.s32.totalorder %s47, 1
      %p190 = por %p188, %p189
      %p192 = scmp.ne.s32.totalorder %s177, %s191
      %p193 = scmp.eq.s32.totalorder %s47, 0
      %p194 = por %p192, %p193
      %s196 = sadd.s32 %s195, 1
      %p199 = scmp.eq.s32.totalorder %s41, 1
      %p200 = scmp.ne.s32.totalorder %s195, %s197
      %p201 = scmp.eq.s32.totalorder %s41, 0
      %p202 = por %p200, %p201
      %p203 = scmp.ne.s32.totalorder %s195, %s197
      %p204 = scmp.eq.s32.totalorder %s46, 1
      %p205 = por %p203, %p204
      %p206 = scmp.ne.s32.totalorder %s197, %s198
      %p207 = scmp.eq.s32.totalorder %s46, 0
      %p208 = por %p206, %p207
      %p209 = scmp.ne.s32.totalorder %s197, %s198
      %p210 = scmp.eq.s32.totalorder %s47, 1
      %p211 = por %p209, %p210
      %p213 = scmp.ne.s32.totalorder %s198, %s212
      %p214 = scmp.eq.s32.totalorder %s47, 0
      %p215 = por %p213, %p214
      %s217 = sadd.s32 %s216, 1
      %p220 = scmp.eq.s32.totalorder %s41, 1
      %p221 = scmp.ne.s32.totalorder %s216, %s218
      %p222 = scmp.eq.s32.totalorder %s41, 0
      %p223 = por %p221, %p222
      %p224 = scmp.ne.s32.totalorder %s216, %s218
      %p225 = scmp.eq.s32.totalorder %s46, 1
      %p226 = por %p224, %p225
      %p227 = scmp.ne.s32.totalorder %s218, %s219
      %p228 = scmp.eq.s32.totalorder %s46, 0
      %p229 = por %p227, %p228
      %p230 = scmp.ne.s32.totalorder %s218, %s219
      %p231 = scmp.eq.s32.totalorder %s47, 1
      %p232 = por %p230, %p231
      %p234 = scmp.ne.s32.totalorder %s219, %s233
      %p235 = scmp.eq.s32.totalorder %s47, 0
      %p236 = por %p234, %p235
      %s238 = sadd.s32 %s237, 1
      %p241 = scmp.eq.s32.totalorder %s41, 1
      %p242 = scmp.ne.s32.totalorder %s237, %s239
      %p243 = scmp.eq.s32.totalorder %s41, 0
      %p244 = por %p242, %p243
      %p245 = scmp.ne.s32.totalorder %s237, %s239
      %p246 = scmp.eq.s32.totalorder %s46, 1
      %p247 = por %p245, %p246
      %p248 = scmp.ne.s32.totalorder %s239, %s240
      %p249 = scmp.eq.s32.totalorder %s46, 0
      %p250 = por %p248, %p249
      %p251 = scmp.ne.s32.totalorder %s239, %s240
      %p252 = scmp.eq.s32.totalorder %s47, 1
      %p253 = por %p251, %p252
      %p255 = scmp.ne.s32.totalorder %s240, %s254
      %p256 = scmp.eq.s32.totalorder %s47, 0
      %p257 = por %p255, %p256
      %s259 = sadd.s32 %s258, 1
      %p262 = scmp.eq.s32.totalorder %s41, 1
      %p263 = scmp.ne.s32.totalorder %s258, %s260
      %p264 = scmp.eq.s32.totalorder %s41, 0
      %p265 = por %p263, %p264
      %p266 = scmp.ne.s32.totalorder %s258, %s260
      %p267 = scmp.eq.s32.totalorder %s46, 1
      %p268 = por %p266, %p267
      %p269 = scmp.ne.s32.totalorder %s260, %s261
      %p270 = scmp.eq.s32.totalorder %s46, 0
      %p271 = por %p269, %p270
      %p272 = scmp.ne.s32.totalorder %s260, %s261
      %p273 = scmp.eq.s32.totalorder %s47, 1
      %p274 = por %p272, %p273
      %p276 = scmp.ne.s32.totalorder %s261, %s275
      %p277 = scmp.eq.s32.totalorder %s47, 0
      %p278 = por %p276, %p277
      %s280 = sadd.s32 %s279, 1
      %p283 = scmp.eq.s32.totalorder %s41, 1
      %p284 = scmp.ne.s32.totalorder %s279, %s281
      %p285 = scmp.eq.s32.totalorder %s41, 0
      %p286 = por %p284, %p285
      %p287 = scmp.ne.s32.totalorder %s279, %s281
      %p288 = scmp.eq.s32.totalorder %s46, 1
      %p289 = por %p287, %p288
      %p290 = scmp.ne.s32.totalorder %s281, %s282
      %p291 = scmp.eq.s32.totalorder %s46, 0
      %p292 = por %p290, %p291
      %p293 = scmp.ne.s32.totalorder %s281, %s282
      %p294 = scmp.eq.s32.totalorder %s47, 1
      %p295 = por %p293, %p294
      %p297 = scmp.ne.s32.totalorder %s282, %s296
      %p298 = scmp.eq.s32.totalorder %s47, 0
      %p299 = por %p297, %p298
      %s301 = sadd.s32 %s300, 1
      %p304 = scmp.eq.s32.totalorder %s41, 1
      %p305 = scmp.ne.s32.totalorder %s300, %s302
      %p306 = scmp.eq.s32.totalorder %s41, 0
      %p307 = por %p305, %p306
      %p308 = scmp.ne.s32.totalorder %s300, %s302
      %p309 = scmp.eq.s32.totalorder %s46, 1
      %p310 = por %p308, %p309
      %p311 = scmp.ne.s32.totalorder %s302, %s303
      %p312 = scmp.eq.s32.totalorder %s46, 0
      %p313 = por %p311, %p312
      %p314 = scmp.ne.s32.totalorder %s302, %s303
      %p315 = scmp.eq.s32.totalorder %s47, 1
      %p316 = por %p314, %p315
      %p318 = scmp.ne.s32.totalorder %s303, %s317
      %p319 = scmp.eq.s32.totalorder %s47, 0
      %p320 = por %p318, %p319
      %s322 = sadd.s32 %s321, 1
      %p325 = scmp.eq.s32.totalorder %s41, 1
      %p326 = scmp.ne.s32.totalorder %s321, %s323
      %p327 = scmp.eq.s32.totalorder %s41, 0
      %p328 = por %p326, %p327
      %p329 = scmp.ne.s32.totalorder %s321, %s323
      %p330 = scmp.eq.s32.totalorder %s46, 1
      %p331 = por %p329, %p330
      %p332 = scmp.ne.s32.totalorder %s323, %s324
      %p333 = scmp.eq.s32.totalorder %s46, 0
      %p334 = por %p332, %p333
      %p335 = scmp.ne.s32.totalorder %s323, %s324
      %p336 = scmp.eq.s32.totalorder %s47, 1
      %p337 = por %p335, %p336
      %p339 = scmp.ne.s32.totalorder %s324, %s338
      %p340 = scmp.eq.s32.totalorder %s47, 0
      %p341 = por %p339, %p340
      %s343 = sadd.s32 %s342, 1
      %p346 = scmp.eq.s32.totalorder %s41, 1
      %p347 = scmp.ne.s32.totalorder %s342, %s344
      %p348 = scmp.eq.s32.totalorder %s41, 0
      %p349 = por %p347, %p348
      %p350 = scmp.ne.s32.totalorder %s342, %s344
      %p351 = scmp.eq.s32.totalorder %s46, 1
      %p352 = por %p350, %p351
      %p353 = scmp.ne.s32.totalorder %s344, %s345
      %p354 = scmp.eq.s32.totalorder %s46, 0
      %p355 = por %p353, %p354
      %p356 = scmp.ne.s32.totalorder %s344, %s345
      %p357 = scmp.eq.s32.totalorder %s47, 1
      %p358 = por %p356, %p357
      %p360 = scmp.ne.s32.totalorder %s345, %s359
      %p361 = scmp.eq.s32.totalorder %s47, 0
      %p362 = por %p360, %p361
      %s364 = sadd.s32 %s363, 1
      %p367 = scmp.eq.s32.totalorder %s41, 1
      %p368 = scmp.ne.s32.totalorder %s363, %s365
      %p369 = scmp.eq.s32.totalorder %s41, 0
      %p370 = por %p368, %p369
      %p371 = scmp.ne.s32.totalorder %s363, %s365
      %p372 = scmp.eq.s32.totalorder %s46, 1
      %p373 = por %p371, %p372
      %p374 = scmp.ne.s32.totalorder %s365, %s366
      %p375 = scmp.eq.s32.totalorder %s46, 0
      %p376 = por %p374, %p375
      %p377 = scmp.ne.s32.totalorder %s365, %s366
      %p378 = scmp.eq.s32.totalorder %s47, 1
      %p379 = por %p377, %p378
      %p381 = scmp.ne.s32.totalorder %s366, %s380
      %p382 = scmp.eq.s32.totalorder %s47, 0
      %p383 = por %p381, %p382
      %s385 = sadd.s32 %s384, 1
      %p388 = scmp.eq.s32.totalorder %s41, 1
      %p389 = scmp.ne.s32.totalorder %s384, %s386
      %p390 = scmp.eq.s32.totalorder %s41, 0
      %p391 = por %p389, %p390
      %p392 = scmp.ne.s32.totalorder %s384, %s386
      %p393 = scmp.eq.s32.totalorder %s46, 1
      %p394 = por %p392, %p393
      %p395 = scmp.ne.s32.totalorder %s386, %s387
      %p396 = scmp.eq.s32.totalorder %s46, 0
      %p397 = por %p395, %p396
      %p398 = scmp.ne.s32.totalorder %s386, %s387
      %p399 = scmp.eq.s32.totalorder %s47, 1
      %p400 = por %p398, %p399
      %p402 = scmp.ne.s32.totalorder %s387, %s401
      %p403 = scmp.eq.s32.totalorder %s47, 0
      %p404 = por %p402, %p403
      %s405 = ssub.s32 %s41, %s48
      %p406 = scmp.eq.s32.totalorder %s405, 0
      %s408 = sadd.s32 %s407, 1
      %s409 = scalar_select %p406, %s407, %s408
      %p412 = pneg %p406
      %p413 = scmp.eq.s32.totalorder %s41, 1
      %p414 = por %p412, %p413
      %p415 = scmp.ne.s32.totalorder %s407, %s410
      %p416 = scmp.eq.s32.totalorder %s41, 0
      %p417 = por %p415, %p416
      %p418 = scmp.ne.s32.totalorder %s407, %s410
      %p419 = scmp.eq.s32.totalorder %s46, 1
      %p420 = por %p418, %p419
      %p421 = scmp.ne.s32.totalorder %s410, %s411
      %p422 = scmp.eq.s32.totalorder %s46, 0
      %p423 = por %p421, %p422
      %p424 = scmp.ne.s32.totalorder %s410, %s411
      %p425 = scmp.eq.s32.totalorder %s47, 1
      %p426 = por %p424, %p425
      %p428 = scmp.ne.s32.totalorder %s411, %s427
      %p429 = scmp.eq.s32.totalorder %s47, 0
      %p430 = por %p428, %p429
      %s431 = ssub.s32 %s41, %s48
      %p432 = scmp.eq.s32.totalorder %s431, 0
      %s434 = sadd.s32 %s433, 1
      %s435 = scalar_select %p432, %s433, %s434
      %p438 = pneg %p432
      %p439 = scmp.eq.s32.totalorder %s41, 1
      %p440 = por %p438, %p439
      %p441 = scmp.ne.s32.totalorder %s433, %s436
      %p442 = scmp.eq.s32.totalorder %s41, 0
      %p443 = por %p441, %p442
      %p444 = scmp.ne.s32.totalorder %s433, %s436
      %p445 = scmp.eq.s32.totalorder %s46, 1
      %p446 = por %p444, %p445
      %p447 = scmp.ne.s32.totalorder %s436, %s437
      %p448 = scmp.eq.s32.totalorder %s46, 0
      %p449 = por %p447, %p448
      %p450 = scmp.ne.s32.totalorder %s436, %s437
      %p451 = scmp.eq.s32.totalorder %s47, 1
      %p452 = por %p450, %p451
      %p454 = scmp.ne.s32.totalorder %s437, %s453
      %p455 = scmp.eq.s32.totalorder %s47, 0
      %p456 = por %p454, %p455
      %p457 = scmp.le.s32.totalorder 1, %s41
      %p458 = scmp.lt.s32.totalorder %s41, 3
      %p459 = pnand %p457, %p458
      %p460 = pneg %p459
      // Predicated region
      $region9: #{tpu_custom_call.1} parent=5 // pred_check
        _
      $region10: #{tpu_custom_call.1} parent=5 // pred_check_branch
        %462 = sbr.rel (%p459) target = $region12
      $region11: #{tpu_custom_call.1} parent=5 // pred_region
        %s463 = ssub.s32 %s41, 1
        // Predicated region
        $region13: #{tpu_custom_call.1} parent=11 // pred_check
          %p464 = pneg %p166
        $region14: #{tpu_custom_call.1} parent=11 // pred_check_branch
          %466 = sbr.rel (%p464) target = $region16
        $region15: #{tpu_custom_call.1} parent=11 // pred_region
          %s468 = ssub.s32 64, 64
          %469 = vsyncadd [#allocation9], %s468
          %s471 = sshll.u32 [#allocation8], 4
          %s472 = int_to_ptr.vmem [resolvable:$true] %s471
          %474 = dma.hbm_to_vmem [thread:$0]  %s4, 64, %s472, [#allocation9]
        $region16: #{tpu_custom_call.1} parent=11 // pred_fallthru
          _
        // Predicated region
        $region17: #{tpu_custom_call.1} parent=11 // pred_check
          %p475 = pneg %p187
        $region18: #{tpu_custom_call.1} parent=11 // pred_check_branch
          %477 = sbr.rel (%p475) target = $region20
        $region19: #{tpu_custom_call.1} parent=11 // pred_region
          %s479 = ssub.s32 16, 16
          %480 = vsyncadd [#allocation9], %s479
          %s482 = sshll.u32 [#allocation10], 4
          %s483 = int_to_ptr.vmem [resolvable:$true] %s482
          %485 = dma.hbm_to_vmem [thread:$0]  %s5, 16, %s483, [#allocation9]
        $region20: #{tpu_custom_call.1} parent=11 // pred_fallthru
          _
        // Predicated region
        $region21: #{tpu_custom_call.1} parent=11 // pred_check
          %p486 = pneg %p208
        $region22: #{tpu_custom_call.1} parent=11 // pred_check_branch
          %488 = sbr.rel (%p486) target = $region24
        $region23: #{tpu_custom_call.1} parent=11 // pred_region
          %s490 = ssub.s32 64, 64
          %491 = vsyncadd [#allocation12], %s490
          %s493 = sshll.u32 [#allocation11], 4
          %s494 = int_to_ptr.vmem [resolvable:$true] %s493
          %496 = dma.hbm_to_vmem [thread:$0]  %s6, 64, %s494, [#allocation12]
        $region24: #{tpu_custom_call.1} parent=11 // pred_fallthru
          _
        // Predicated region
        $region25: #{tpu_custom_call.1} parent=11 // pred_check
          %p497 = pneg %p229
        $region26: #{tpu_custom_call.1} parent=11 // pred_check_branch
          %499 = sbr.rel (%p497) target = $region28
        $region27: #{tpu_custom_call.1} parent=11 // pred_region
          %s501 = ssub.s32 16, 16
          %502 = vsyncadd [#allocation12], %s501
          %s504 = sshll.u32 [#allocation13], 4
          %s505 = int_to_ptr.vmem [resolvable:$true] %s504
          %507 = dma.hbm_to_vmem [thread:$0]  %s7, 16, %s505, [#allocation12]
        $region28: #{tpu_custom_call.1} parent=11 // pred_fallthru
          _
        // Predicated region
        $region29: #{tpu_custom_call.1} parent=11 // pred_check
          %p508 = pneg %p250
        $region30: #{tpu_custom_call.1} parent=11 // pred_check_branch
          %510 = sbr.rel (%p508) target = $region32
        $region31: #{tpu_custom_call.1} parent=11 // pred_region
          %s512 = ssub.s32 64, 64
          %513 = vsyncadd [#allocation15], %s512
          %s515 = sshll.u32 [#allocation14], 4
          %s516 = int_to_ptr.vmem [resolvable:$true] %s515
          %518 = dma.hbm_to_vmem [thread:$0]  %s8, 64, %s516, [#allocation15]
        $region32: #{tpu_custom_call.1} parent=11 // pred_fallthru
          _
        // Predicated region
        $region33: #{tpu_custom_call.1} parent=11 // pred_check
          %p519 = pneg %p271
        $region34: #{tpu_custom_call.1} parent=11 // pred_check_branch
          %521 = sbr.rel (%p519) target = $region36
        $region35: #{tpu_custom_call.1} parent=11 // pred_region
          %s523 = ssub.s32 16, 16
          %524 = vsyncadd [#allocation15], %s523
          %s526 = sshll.u32 [#allocation16], 4
          %s527 = int_to_ptr.vmem [resolvable:$true] %s526
          %529 = dma.hbm_to_vmem [thread:$0]  %s9, 16, %s527, [#allocation15]
        $region36: #{tpu_custom_call.1} parent=11 // pred_fallthru
          _
        // Predicated region
        $region37: #{tpu_custom_call.1} parent=11 // pred_check
          %p530 = pneg %p292
        $region38: #{tpu_custom_call.1} parent=11 // pred_check_branch
          %532 = sbr.rel (%p530) target = $region40
        $region39: #{tpu_custom_call.1} parent=11 // pred_region
          _
        $region40: #{tpu_custom_call.1} parent=11 // pred_fallthru
          _
        // Predicated region
        $region41: #{tpu_custom_call.1} parent=11 // pred_check
          %p533 = pneg %p313
        $region42: #{tpu_custom_call.1} parent=11 // pred_check_branch
          %535 = sbr.rel (%p533) target = $region44
        $region43: #{tpu_custom_call.1} parent=11 // pred_region
          %s537 = ssub.s32 16, 16
          %538 = vsyncadd [#allocation18], %s537
          %s540 = sshll.u32 [#allocation17], 4
          %s541 = int_to_ptr.vmem [resolvable:$true] %s540
          %543 = dma.hbm_to_vmem [thread:$0]  %s11, 16, %s541, [#allocation18]
        $region44: #{tpu_custom_call.1} parent=11 // pred_fallthru
          _
        // Predicated region
        $region45: #{tpu_custom_call.1} parent=11 // pred_check
          %p544 = pneg %p334
        $region46: #{tpu_custom_call.1} parent=11 // pred_check_branch
          %546 = sbr.rel (%p544) target = $region48
        $region47: #{tpu_custom_call.1} parent=11 // pred_region
          %s548 = ssub.s32 256, 256
          %549 = vsyncadd [#allocation18], %s548
          %s550 = sshll.u32 [#allocation19], 4
          %s551 = int_to_ptr.vmem [resolvable:$true] %s550
          %556 = dma.hbm_to_vmem [thread:$0]  %s12, 256, %s551, [#allocation18], 64, 64, 4
        $region48: #{tpu_custom_call.1} parent=11 // pred_fallthru
          _
        // Predicated region
        $region49: #{tpu_custom_call.1} parent=11 // pred_check
          %p557 = pneg %p355
        $region50: #{tpu_custom_call.1} parent=11 // pred_check_branch
          %559 = sbr.rel (%p557) target = $region52
        $region51: #{tpu_custom_call.1} parent=11 // pred_region
          %s561 = ssub.s32 16, 16
          %562 = vsyncadd [#allocation21], %s561
          %s564 = sshll.u32 [#allocation20], 4
          %s565 = int_to_ptr.vmem [resolvable:$true] %s564
          %567 = dma.hbm_to_vmem [thread:$0]  %s13, 16, %s565, [#allocation21]
        $region52: #{tpu_custom_call.1} parent=11 // pred_fallthru
          _
        // Predicated region
        $region53: #{tpu_custom_call.1} parent=11 // pred_check
          %p568 = pneg %p376
        $region54: #{tpu_custom_call.1} parent=11 // pred_check_branch
          %570 = sbr.rel (%p568) target = $region56
        $region55: #{tpu_custom_call.1} parent=11 // pred_region
          _
        $region56: #{tpu_custom_call.1} parent=11 // pred_fallthru
          _
        // Predicated region
        $region57: #{tpu_custom_call.1} parent=11 // pred_check
          %p571 = pneg %p397
        $region58: #{tpu_custom_call.1} parent=11 // pred_check_branch
          %573 = sbr.rel (%p571) target = $region60
        $region59: #{tpu_custom_call.1} parent=11 // pred_region
          _
        $region60: #{tpu_custom_call.1} parent=11 // pred_fallthru
          _
      $region12: #{tpu_custom_call.1} parent=5 // pred_fallthru
        _
      %p574 = scmp.lt.s32.totalorder %s41, 2
      // Predicated region
      $region61: #{tpu_custom_call.1} parent=5 // pred_check
        %p575 = pneg %p574
      $region62: #{tpu_custom_call.1} parent=5 // pred_check_branch
        %577 = sbr.rel (%p575) target = $region64
      $region63: #{tpu_custom_call.1} parent=5 // pred_region
        // Predicated region
        $region65: #{tpu_custom_call.1} parent=63 // pred_check
          %p578 = pneg %p61
        $region66: #{tpu_custom_call.1} parent=63 // pred_check_branch
          %580 = sbr.rel (%p578) target = $region68
        $region67: #{tpu_custom_call.1} parent=63 // pred_region
          %s581 = smul.u32 4, %s41
          %p582 = scmp.lt.s32.totalorder %s581, 7
          %s583 = scalar_select %p582, %s581, 7
          %s584 = smul.addr %s583, 4
          %s585 = scalar_lea.vmem %s0, %s584
          %s586 = smul.u32 4, %s41
        $region68: #{tpu_custom_call.1} parent=63 // pred_fallthru
          _
        // Predicated region
        $region69: #{tpu_custom_call.1} parent=63 // pred_check
          %p587 = pneg %p87
        $region70: #{tpu_custom_call.1} parent=63 // pred_check_branch
          %589 = sbr.rel (%p587) target = $region72
        $region71: #{tpu_custom_call.1} parent=63 // pred_region
          %s590 = sand.u32 %s77, 1
          %s591 = scalar_lea.sflag [#allocation3], %s590
          %s592 = sand.u32 %s77, 1
          %s593 = smul.addr %s592, 4
          %s594 = scalar_lea.vmem [#allocation2], %s593
          %s596 = ssub.s32 64, 64
          %597 = vsyncadd %s591, %s596
          %s598 = smul.addr %s41, 64
          %s599 = scalar_lea.hbm %s1, %s598
          %s601 = sshll.u32 %s594, 4
          %s602 = int_to_ptr.vmem [resolvable:$true] %s601
          %604 = dma.hbm_to_vmem [thread:$0]  %s599, 64, %s602, %s591
        $region72: #{tpu_custom_call.1} parent=63 // pred_fallthru
          _
        // Predicated region
        $region73: #{tpu_custom_call.1} parent=63 // pred_check
          %p605 = pneg %p113
        $region74: #{tpu_custom_call.1} parent=63 // pred_check_branch
          %607 = sbr.rel (%p605) target = $region76
        $region75: #{tpu_custom_call.1} parent=63 // pred_region
          %s608 = sand.u32 %s41, 1
          %s609 = scalar_lea.sflag [#allocation6], %s608
          %s610 = sand.u32 %s103, 1
          %s611 = smul.addr %s610, 32
          %s612 = scalar_lea.vmem [#allocation5], %s611
          %s613 = smul.u32 4, %s41
          %s615 = ssub.s32 512, 512
          %616 = vsyncadd %s609, %s615
          %s617 = smul.addr %s613, 128
          %s618 = scalar_lea.hbm %s2, %s617
          %s619 = sshll.u32 %s612, 4
          %s620 = int_to_ptr.vmem [resolvable:$true] %s619
          %625 = dma.hbm_to_vmem [thread:$0]  %s618, 512, %s620, %s609, 128, 128, 8
        $region76: #{tpu_custom_call.1} parent=63 // pred_fallthru
          _
        // Predicated region
        $region77: #{tpu_custom_call.1} parent=63 // pred_check
          %p626 = pneg %p139
        $region78: #{tpu_custom_call.1} parent=63 // pred_check_branch
          %628 = sbr.rel (%p626) target = $region80
        $region79: #{tpu_custom_call.1} parent=63 // pred_region
          %s629 = sand.u32 %s41, 1
          %s630 = scalar_lea.sflag [#allocation6], %s629
          %s631 = sand.u32 %s129, 1
          %s632 = smul.addr %s631, 24
          %s633 = scalar_lea.vmem [#allocation7], %s632
          %s635 = ssub.s32 384, 384
          %636 = vsyncadd %s630, %s635
          %s637 = smul.addr %s41, 3
          %s638 = smul.addr %s637, 128
          %s639 = scalar_lea.hbm %s3, %s638
          %s641 = sshll.u32 %s633, 4
          %s642 = int_to_ptr.vmem [resolvable:$true] %s641
          %644 = dma.hbm_to_vmem [thread:$0]  %s639, 384, %s642, %s630
        $region80: #{tpu_custom_call.1} parent=63 // pred_fallthru
          _
      $region64: #{tpu_custom_call.1} parent=5 // pred_fallthru
        _
      %p645 = scmp.le.s32.totalorder 1, %s41
      %p646 = scmp.lt.s32.totalorder %s41, 3
      %p647 = pnand %p645, %p646
      %p648 = pneg %p647
      // Predicated region
      $region81: #{tpu_custom_call.1} parent=5 // pred_check
        _
      $region82: #{tpu_custom_call.1} parent=5 // pred_check_branch
        %650 = sbr.rel (%p647) target = $region84
      $region83: #{tpu_custom_call.1} parent=5 // pred_region
        %s651 = ssub.s32 %s41, 1
        %s652 = sand.u32 %s80, 1
        %s653 = scalar_lea.sflag [#allocation3], %s652
        %s654 = sand.u32 %s80, 1
        %s655 = smul.addr %s654, 4
        %s656 = scalar_lea.vmem [#allocation2], %s655
        // Predicated region
        $region85: #{tpu_custom_call.1} parent=83 // pred_check
          %p657 = pneg %p93
        $region86: #{tpu_custom_call.1} parent=83 // pred_check_branch
          %659 = sbr.rel (%p657) target = $region88
        $region87: #{tpu_custom_call.1} parent=83 // pred_region
          %660 = dma.done %s653, 64
        $region88: #{tpu_custom_call.1} parent=83 // pred_fallthru
          _
        %s661 = sand.u32 %s46, 1
        %s662 = scalar_lea.sflag [#allocation6], %s661
        %s663 = sand.u32 %s106, 1
        %s664 = smul.addr %s663, 32
        %s665 = scalar_lea.vmem [#allocation5], %s664
        // Predicated region
        $region89: #{tpu_custom_call.1} parent=83 // pred_check
          %p666 = pneg %p119
        $region90: #{tpu_custom_call.1} parent=83 // pred_check_branch
          %668 = sbr.rel (%p666) target = $region92
        $region91: #{tpu_custom_call.1} parent=83 // pred_region
          %669 = dma.done %s662, 512
        $region92: #{tpu_custom_call.1} parent=83 // pred_fallthru
          _
        %s670 = sand.u32 %s46, 1
        %s671 = scalar_lea.sflag [#allocation6], %s670
        %s672 = sand.u32 %s132, 1
        %s673 = smul.addr %s672, 24
        %s674 = scalar_lea.vmem [#allocation7], %s673
        // Predicated region
        $region93: #{tpu_custom_call.1} parent=83 // pred_check
          %p675 = pneg %p145
        $region94: #{tpu_custom_call.1} parent=83 // pred_check_branch
          %677 = sbr.rel (%p675) target = $region96
        $region95: #{tpu_custom_call.1} parent=83 // pred_region
          %678 = dma.done %s671, 384
        $region96: #{tpu_custom_call.1} parent=83 // pred_fallthru
          _
        // Predicated region
        $region97: #{tpu_custom_call.1} parent=83 // pred_check
          %p679 = pneg %p166
        $region98: #{tpu_custom_call.1} parent=83 // pred_check_branch
          %681 = sbr.rel (%p679) target = $region100
        $region99: #{tpu_custom_call.1} parent=83 // pred_region
          %682 = dma.done [#allocation9], 64
        $region100: #{tpu_custom_call.1} parent=83 // pred_fallthru
          _
        // Predicated region
        $region101: #{tpu_custom_call.1} parent=83 // pred_check
          %p683 = pneg %p187
        $region102: #{tpu_custom_call.1} parent=83 // pred_check_branch
          %685 = sbr.rel (%p683) target = $region104
        $region103: #{tpu_custom_call.1} parent=83 // pred_region
          %686 = dma.done [#allocation9], 16
        $region104: #{tpu_custom_call.1} parent=83 // pred_fallthru
          _
        // Predicated region
        $region105: #{tpu_custom_call.1} parent=83 // pred_check
          %p687 = pneg %p208
        $region106: #{tpu_custom_call.1} parent=83 // pred_check_branch
          %689 = sbr.rel (%p687) target = $region108
        $region107: #{tpu_custom_call.1} parent=83 // pred_region
          %690 = dma.done [#allocation12], 64
        $region108: #{tpu_custom_call.1} parent=83 // pred_fallthru
          _
        // Predicated region
        $region109: #{tpu_custom_call.1} parent=83 // pred_check
          %p691 = pneg %p229
        $region110: #{tpu_custom_call.1} parent=83 // pred_check_branch
          %693 = sbr.rel (%p691) target = $region112
        $region111: #{tpu_custom_call.1} parent=83 // pred_region
          %694 = dma.done [#allocation12], 16
        $region112: #{tpu_custom_call.1} parent=83 // pred_fallthru
          _
        // Predicated region
        $region113: #{tpu_custom_call.1} parent=83 // pred_check
          %p695 = pneg %p250
        $region114: #{tpu_custom_call.1} parent=83 // pred_check_branch
          %697 = sbr.rel (%p695) target = $region116
        $region115: #{tpu_custom_call.1} parent=83 // pred_region
          %698 = dma.done [#allocation15], 64
        $region116: #{tpu_custom_call.1} parent=83 // pred_fallthru
          _
        // Predicated region
        $region117: #{tpu_custom_call.1} parent=83 // pred_check
          %p699 = pneg %p271
        $region118: #{tpu_custom_call.1} parent=83 // pred_check_branch
          %701 = sbr.rel (%p699) target = $region120
        $region119: #{tpu_custom_call.1} parent=83 // pred_region
          %702 = dma.done [#allocation15], 16
        $region120: #{tpu_custom_call.1} parent=83 // pred_fallthru
          _
        // Predicated region
        $region121: #{tpu_custom_call.1} parent=83 // pred_check
          %p703 = pneg %p313
        $region122: #{tpu_custom_call.1} parent=83 // pred_check_branch
          %705 = sbr.rel (%p703) target = $region124
        $region123: #{tpu_custom_call.1} parent=83 // pred_region
          %706 = dma.done [#allocation18], 16
        $region124: #{tpu_custom_call.1} parent=83 // pred_fallthru
          _
        // Predicated region
        $region125: #{tpu_custom_call.1} parent=83 // pred_check
          %p707 = pneg %p334
        $region126: #{tpu_custom_call.1} parent=83 // pred_check_branch
          %709 = sbr.rel (%p707) target = $region128
        $region127: #{tpu_custom_call.1} parent=83 // pred_region
          %710 = dma.done [#allocation18], 256
        $region128: #{tpu_custom_call.1} parent=83 // pred_fallthru
          _
        // Predicated region
        $region129: #{tpu_custom_call.1} parent=83 // pred_check
          %p711 = pneg %p355
        $region130: #{tpu_custom_call.1} parent=83 // pred_check_branch
          %713 = sbr.rel (%p711) target = $region132
        $region131: #{tpu_custom_call.1} parent=83 // pred_region
          %714 = dma.done [#allocation21], 16
        $region132: #{tpu_custom_call.1} parent=83 // pred_fallthru
          _
        %s715 = smul.u32 4, %s46
        %p716 = scmp.lt.s32.totalorder %s715, 7
        %s717 = scalar_select %p716, %s715, 7
        %s718 = smul.addr %s717, 4
        %s719 = scalar_lea.vmem %s0, %s718
        %p720 = pneg %p67
        %p721 = pneg %p64
        %s722 = sand.u32 %s80, 1
        %s723 = scalar_lea.sflag [#allocation3], %s722
        %s724 = sand.u32 %s80, 1
        %s725 = smul.addr %s724, 4
        %s726 = scalar_lea.vmem [#allocation2], %s725
        %p727 = pneg %p93
        %p728 = pneg %p90
        %s729 = sand.u32 %s46, 1
        %s730 = scalar_lea.sflag [#allocation6], %s729
        %s731 = sand.u32 %s106, 1
        %s732 = smul.addr %s731, 32
        %s733 = scalar_lea.vmem [#allocation5], %s732
        %p734 = pneg %p119
        %p735 = pneg %p116
        %s736 = sand.u32 %s46, 1
        %s737 = scalar_lea.sflag [#allocation6], %s736
        %s738 = sand.u32 %s132, 1
        %s739 = smul.addr %s738, 24
        %s740 = scalar_lea.vmem [#allocation7], %s739
        %p741 = pneg %p145
        %p742 = pneg %p142
        %p743 = pneg %p166
        %p744 = pneg %p163
        %p745 = pneg %p187
        %p746 = pneg %p184
        %p747 = pneg %p208
        %p748 = pneg %p205
        %p749 = pneg %p229
        %p750 = pneg %p226
        %p751 = pneg %p250
        %p752 = pneg %p247
        %p753 = pneg %p271
        %p754 = pneg %p268
        %p755 = pneg %p292
        %p756 = pneg %p289
        %p757 = pneg %p313
        %p758 = pneg %p310
        %p759 = pneg %p334
        %p760 = pneg %p331
        %p761 = pneg %p355
        %p762 = pneg %p352
        %p763 = pneg %p376
        %p764 = pneg %p373
        %p765 = pneg %p397
        %p766 = pneg %p394
        %p767 = pneg %p423
        %p768 = pneg %p420
        %s769 = sand.u32 %s410, 1
        %s770 = scalar_lea.sflag [#allocation4], %s769
        %s771 = sand.u32 %s410, 1
        %s772 = smul.addr %s771, 32
        %s773 = scalar_lea.vmem [#allocation22], %s772
        %p774 = pneg %p449
        %p775 = pneg %p446
        %s776 = sand.u32 %s436, 1
        %s777 = scalar_lea.sflag [#allocation24], %s776
        %s778 = sand.u32 %s436, 1
        %s779 = smul.addr %s778, 24
        %s780 = scalar_lea.vmem [#allocation23], %s779
        %s781 = smul.u32 4, %s46
        %p782 = scmp.lt.s32.totalorder %s781, 7
        %s783 = scalar_select %p782, %s781, 7
        %s784 = smul.addr %s783, 4
        %s785 = scalar_lea.vmem %s0, %s784
        %s786 = smul.u32 4, %s46
        %s787 = smul.u32 4, %s46
        %s788 = smul.u32 4, %s46
        %v790 = vld [vmem:[%s785] sm:$0xf]
        %v791 = vld [vmem:[%s785 + $0x4] sm:$0xf]
        %v792 = vld [vmem:[%s785 + $0x8] sm:$0xf]
        %v793 = vld [vmem:[%s785 + $0xc] sm:$0xf]
        %v794 = vld [vmem:[#allocation8] sm:$0xf]
        %v795 = vld [vmem:[#allocation10] sm:$0x1]
        %v797 = vlaneseq
        %v798 = vshrl.u32 %v797, 7
        %v799 = vsub.s32 0, %v798
        %v800 = vrot.slane %v795, %v799
        %v806 = vunpack.c.l.b16 %v790
        %v807 = vunpack.c.l.b16 %v791
        %v808 = vunpack.c.l.b16 %v792
        %v809 = vunpack.c.l.b16 %v793
        %v810 = vpack.c.b16 %v807, %v806
        %v811 = vpack.c.b16 %v809, %v808
        %vm812 = vcmask 64512
        %v814 = vsel %vm812, %v810, 0
        %v817 = vsel %vm812, %v811, 0
        %vm819 = vcmask 1043456
        %v821 = vsel %vm819, %v794, 0
        %823 = vmatprep.subr.bf16.mxu0 0
        %824 = vmatpush1.bf16.msra.mxu0 %v821
        %825 = vmatprep.subr.bf16.mxu0 0
        %826 = vmatpush1.bf16.msra.mxu0 0
        %827 = vmatprep.subr.bf16.mxu0 0
        %828 = vmatpush1.bf16.msra.mxu0 0
        %829 = vmatprep.subr.bf16.mxu0 0
        %830 = vmatpush1.bf16.msra.mxu0 0
        %831 = vmatprep.subr.bf16.mxu0 0
        %832 = vmatpush1.bf16.msra.mxu0 0
        %833 = vmatprep.subr.bf16.mxu0 0
        %834 = vmatpush1.bf16.msra.mxu0 0
        %835 = vmatprep.subr.bf16.mxu0 0
        %836 = vmatpush1.bf16.msra.mxu0 0
        %837 = vmatprep.subr.bf16.mxu0 0
        %838 = vmatpush1.bf16.msra.mxu0 0
        %839 = vmatprep.subr.bf16.mxu0 0
        %840 = vmatpush1.bf16.msra.mxu0 0
        %841 = vmatprep.subr.bf16.mxu0 0
        %842 = vmatpush1.bf16.msra.mxu0 0
        %843 = vmatprep.subr.bf16.mxu0 0
        %844 = vmatpush1.bf16.msra.mxu0 0
        %845 = vmatprep.subr.bf16.mxu0 0
        %846 = vmatpush1.bf16.msra.mxu0 0
        %847 = vmatprep.subr.bf16.mxu0 0
        %848 = vmatpush1.bf16.msra.mxu0 0
        %849 = vmatprep.subr.bf16.mxu0 0
        %850 = vmatpush1.bf16.msra.mxu0 0
        %851 = vmatprep.subr.bf16.mxu0 0
        %852 = vmatpush1.bf16.msra.mxu0 0
        %853 = vmatprep.subr.bf16.mxu0 0
        %854 = vmatpush1.bf16.msra.mxu0 0
        %855 = vmatprep.mubr.bf16.mxu0 0
        %856 = vmatmul.mubr.bf16.gmra.mrb[0].mxu0 %v814
        %v857 = vpop.f32.mrb[0].mxu0
        %v858 = vadd.f32 %v800, %v857
        %v859 = vpop.f32.mrb[0].mxu0
        %v860 = vpop.f32.mrb[0].mxu0
        %v861 = vadd.f32 %v800, %v860
        %v862 = vpop.f32.mrb[0].mxu0
        %863 = vmatprep.mubr.bf16.mxu0 0
        %864 = vmatmul.mubr.bf16.gmra.mrb[0].mxu0 %v817
        %v865 = vpop.f32.mrb[0].mxu0
        %v866 = vadd.f32 %v800, %v865
        %v867 = vpop.f32.mrb[0].mxu0
        %v868 = vpop.f32.mrb[0].mxu0
        %v869 = vadd.f32 %v800, %v868
        %v870 = vpop.f32.mrb[0].mxu0
        %871 = vdwg.mxu0
        %vm872 = vcmp.gt.f32.partialorder %v858, 0.0
        %vm873 = vcmp.gt.f32.partialorder %v861, 0.0
        %vm874 = vcmp.gt.f32.partialorder %v866, 0.0
        %vm875 = vcmp.gt.f32.partialorder %v869, 0.0
        %v876 = vmul.f32 %v858, 0.02
        %v877 = vmul.f32 %v861, 0.02
        %v878 = vmul.f32 %v866, 0.02
        %v879 = vmul.f32 %v869, 0.02
        %v880 = vsel %vm872, %v858, %v876
        %v881 = vsel %vm873, %v861, %v877
        %v882 = vsel %vm874, %v866, %v878
        %v883 = vsel %vm875, %v869, %v879
        %v884 = vpack.c.bf16 %v881, %v880
        %v885 = vpack.c.bf16 %v883, %v882
        %v886 = vld [vmem:[#allocation11] sm:$0xf]
        %v887 = vld [vmem:[#allocation13] sm:$0x1]
        %v889 = vlaneseq
        %v890 = vshrl.u32 %v889, 7
        %v891 = vsub.s32 0, %v890
        %v892 = vrot.slane %v887, %v891
        %v895 = vsel %vm812, %v884, 0
        %v898 = vsel %vm812, %v885, 0
        %v901 = vsel %vm819, %v886, 0
        %903 = vmatprep.subr.bf16.mxu0 0
        %904 = vmatpush1.bf16.msra.mxu0 %v901
        %905 = vmatprep.subr.bf16.mxu0 0
        %906 = vmatpush1.bf16.msra.mxu0 0
        %907 = vmatprep.subr.bf16.mxu0 0
        %908 = vmatpush1.bf16.msra.mxu0 0
        %909 = vmatprep.subr.bf16.mxu0 0
        %910 = vmatpush1.bf16.msra.mxu0 0
        %911 = vmatprep.subr.bf16.mxu0 0
        %912 = vmatpush1.bf16.msra.mxu0 0
        %913 = vmatprep.subr.bf16.mxu0 0
        %914 = vmatpush1.bf16.msra.mxu0 0
        %915 = vmatprep.subr.bf16.mxu0 0
        %916 = vmatpush1.bf16.msra.mxu0 0
        %917 = vmatprep.subr.bf16.mxu0 0
        %918 = vmatpush1.bf16.msra.mxu0 0
        %919 = vmatprep.subr.bf16.mxu0 0
        %920 = vmatpush1.bf16.msra.mxu0 0
        %921 = vmatprep.subr.bf16.mxu0 0
        %922 = vmatpush1.bf16.msra.mxu0 0
        %923 = vmatprep.subr.bf16.mxu0 0
        %924 = vmatpush1.bf16.msra.mxu0 0
        %925 = vmatprep.subr.bf16.mxu0 0
        %926 = vmatpush1.bf16.msra.mxu0 0
        %927 = vmatprep.subr.bf16.mxu0 0
        %928 = vmatpush1.bf16.msra.mxu0 0
        %929 = vmatprep.subr.bf16.mxu0 0
        %930 = vmatpush1.bf16.msra.mxu0 0
        %931 = vmatprep.subr.bf16.mxu0 0
        %932 = vmatpush1.bf16.msra.mxu0 0
        %933 = vmatprep.subr.bf16.mxu0 0
        %934 = vmatpush1.bf16.msra.mxu0 0
        %935 = vmatprep.mubr.bf16.mxu0 0
        %936 = vmatmul.mubr.bf16.gmra.mrb[0].mxu0 %v895
        %v937 = vpop.f32.mrb[0].mxu0
        %v938 = vadd.f32 %v892, %v937
        %v939 = vpop.f32.mrb[0].mxu0
        %v940 = vpop.f32.mrb[0].mxu0
        %v941 = vadd.f32 %v892, %v940
        %v942 = vpop.f32.mrb[0].mxu0
        %943 = vmatprep.mubr.bf16.mxu0 0
        %944 = vmatmul.mubr.bf16.gmra.mrb[0].mxu0 %v898
        %v945 = vpop.f32.mrb[0].mxu0
        %v946 = vadd.f32 %v892, %v945
        %v947 = vpop.f32.mrb[0].mxu0
        %v948 = vpop.f32.mrb[0].mxu0
        %v949 = vadd.f32 %v892, %v948
        %v950 = vpop.f32.mrb[0].mxu0
        %951 = vdwg.mxu0
        %vm952 = vcmp.gt.f32.partialorder %v938, 0.0
        %vm953 = vcmp.gt.f32.partialorder %v941, 0.0
        %vm954 = vcmp.gt.f32.partialorder %v946, 0.0
        %vm955 = vcmp.gt.f32.partialorder %v949, 0.0
        %v956 = vmul.f32 %v938, 0.02
        %v957 = vmul.f32 %v941, 0.02
        %v958 = vmul.f32 %v946, 0.02
        %v959 = vmul.f32 %v949, 0.02
        %v960 = vsel %vm952, %v938, %v956
        %v961 = vsel %vm953, %v941, %v957
        %v962 = vsel %vm954, %v946, %v958
        %v963 = vsel %vm955, %v949, %v959
        %v964 = vpack.c.bf16 %v961, %v960
        %v965 = vpack.c.bf16 %v963, %v962
        %v966 = vld [vmem:[#allocation14] sm:$0xf]
        %v967 = vld [vmem:[#allocation16] sm:$0x1]
        %v969 = vlaneseq
        %v970 = vshrl.u32 %v969, 7
        %v971 = vsub.s32 0, %v970
        %v972 = vrot.slane %v967, %v971
        %v975 = vsel %vm812, %v964, 0
        %v978 = vsel %vm812, %v965, 0
        %v981 = vsel %vm819, %v966, 0
        %983 = vmatprep.subr.bf16.mxu0 0
        %984 = vmatpush1.bf16.msra.mxu0 %v981
        %985 = vmatprep.subr.bf16.mxu0 0
        %986 = vmatpush1.bf16.msra.mxu0 0
        %987 = vmatprep.subr.bf16.mxu0 0
        %988 = vmatpush1.bf16.msra.mxu0 0
        %989 = vmatprep.subr.bf16.mxu0 0
        %990 = vmatpush1.bf16.msra.mxu0 0
        %991 = vmatprep.subr.bf16.mxu0 0
        %992 = vmatpush1.bf16.msra.mxu0 0
        %993 = vmatprep.subr.bf16.mxu0 0
        %994 = vmatpush1.bf16.msra.mxu0 0
        %995 = vmatprep.subr.bf16.mxu0 0
        %996 = vmatpush1.bf16.msra.mxu0 0
        %997 = vmatprep.subr.bf16.mxu0 0
        %998 = vmatpush1.bf16.msra.mxu0 0
        %999 = vmatprep.subr.bf16.mxu0 0
        %1000 = vmatpush1.bf16.msra.mxu0 0
        %1001 = vmatprep.subr.bf16.mxu0 0
        %1002 = vmatpush1.bf16.msra.mxu0 0
        %1003 = vmatprep.subr.bf16.mxu0 0
        %1004 = vmatpush1.bf16.msra.mxu0 0
        %1005 = vmatprep.subr.bf16.mxu0 0
        %1006 = vmatpush1.bf16.msra.mxu0 0
        %1007 = vmatprep.subr.bf16.mxu0 0
        %1008 = vmatpush1.bf16.msra.mxu0 0
        %1009 = vmatprep.subr.bf16.mxu0 0
        %1010 = vmatpush1.bf16.msra.mxu0 0
        %1011 = vmatprep.subr.bf16.mxu0 0
        %1012 = vmatpush1.bf16.msra.mxu0 0
        %1013 = vmatprep.subr.bf16.mxu0 0
        %1014 = vmatpush1.bf16.msra.mxu0 0
        %1015 = vmatprep.mubr.bf16.mxu0 0
        %1016 = vmatmul.mubr.bf16.gmra.mrb[0].mxu0 %v975
        %v1017 = vpop.f32.mrb[0].mxu0
        %v1018 = vadd.f32 %v972, %v1017
        %v1019 = vpop.f32.mrb[0].mxu0
        %v1020 = vpop.f32.mrb[0].mxu0
        %v1021 = vadd.f32 %v972, %v1020
        %v1022 = vpop.f32.mrb[0].mxu0
        %1023 = vmatprep.mubr.bf16.mxu0 0
        %1024 = vmatmul.mubr.bf16.gmra.mrb[0].mxu0 %v978
        %v1025 = vpop.f32.mrb[0].mxu0
        %v1026 = vadd.f32 %v972, %v1025
        %v1027 = vpop.f32.mrb[0].mxu0
        %v1028 = vpop.f32.mrb[0].mxu0
        %v1029 = vadd.f32 %v972, %v1028
        %v1030 = vpop.f32.mrb[0].mxu0
        %1031 = vdwg.mxu0
        %v1032 = vld [vmem:[%s665] sm:$0xff]
        %v1033 = vld [vmem:[%s665 + $0x8] sm:$0xff]
        %v1034 = vld [vmem:[%s665 + $0x10] sm:$0xff]
        %v1035 = vld [vmem:[%s665 + $0x18] sm:$0xff]
        %v1036 = vadd.f32 %v1018, %v1032
        %v1037 = vadd.f32 %v1021, %v1033
        %v1038 = vadd.f32 %v1026, %v1034
        %v1039 = vadd.f32 %v1029, %v1035
        %1040 = vmax.xlane.f32.xlu0 %v1036
        %v1041 = vpop.xlane.xlu0 %1040
        %1042 = vmax.xlane.f32.xlu0 %v1037
        %v1043 = vpop.xlane.xlu0 %1042
        %1044 = vmax.xlane.f32.xlu0 %v1038
        %v1045 = vpop.xlane.xlu0 %1044
        %1046 = vmax.xlane.f32.xlu0 %v1039
        %v1047 = vpop.xlane.xlu0 %1046
        %v1048 = vlaneseq
        %v1049 = vand.u32 %v1048, 127
        %vm1050 = vcmp.eq.f32.partialorder %v1036, %v1041
        %vm1051 = vcmp.eq.f32.partialorder %v1037, %v1043
        %vm1052 = vcmp.eq.f32.partialorder %v1038, %v1045
        %vm1053 = vcmp.eq.f32.partialorder %v1039, %v1047
        %v1054 = vsel %vm1050, %v1049, 128
        %v1055 = vsel %vm1051, %v1049, 128
        %v1056 = vsel %vm1052, %v1049, 128
        %v1057 = vsel %vm1053, %v1049, 128
        %v1058 = vand.u32 %v1054, 65535
        %v1059 = vshra.s32 %v1054, 16
        %v1060 = vcvt.s32.f32 %v1058
        %v1061 = vcvt.s32.f32 %v1059
        %1062 = vmin.xlane.f32.xlu0 %v1061
        %v1063 = vpop.xlane.xlu0 %1062
        %vm1064 = vcmp.eq.f32.partialorder %v1061, %v1063
        %v1065 = vsel %vm1064, %v1060, inf
        %1066 = vmin.xlane.f32.xlu0 %v1065
        %v1067 = vpop.xlane.xlu0 %1066
        %v1068 = vcvt.f32.s32 %v1067
        %v1069 = vcvt.f32.s32 %v1063
        %v1070 = vshll.u32 %v1069, 16
        %v1071 = vadd.s32 %v1070, %v1068
        %v1072 = vand.u32 %v1055, 65535
        %v1073 = vshra.s32 %v1055, 16
        %v1074 = vcvt.s32.f32 %v1072
        %v1075 = vcvt.s32.f32 %v1073
        %1076 = vmin.xlane.f32.xlu0 %v1075
        %v1077 = vpop.xlane.xlu0 %1076
        %vm1078 = vcmp.eq.f32.partialorder %v1075, %v1077
        %v1079 = vsel %vm1078, %v1074, inf
        %1080 = vmin.xlane.f32.xlu0 %v1079
        %v1081 = vpop.xlane.xlu0 %1080
        %v1082 = vcvt.f32.s32 %v1081
        %v1083 = vcvt.f32.s32 %v1077
        %v1084 = vshll.u32 %v1083, 16
        %v1085 = vadd.s32 %v1084, %v1082
        %v1086 = vand.u32 %v1056, 65535
        %v1087 = vshra.s32 %v1056, 16
        %v1088 = vcvt.s32.f32 %v1086
        %v1089 = vcvt.s32.f32 %v1087
        %1090 = vmin.xlane.f32.xlu0 %v1089
        %v1091 = vpop.xlane.xlu0 %1090
        %vm1092 = vcmp.eq.f32.partialorder %v1089, %v1091
        %v1093 = vsel %vm1092, %v1088, inf
        %1094 = vmin.xlane.f32.xlu0 %v1093
        %v1095 = vpop.xlane.xlu0 %1094
        %v1096 = vcvt.f32.s32 %v1095
        %v1097 = vcvt.f32.s32 %v1091
        %v1098 = vshll.u32 %v1097, 16
        %v1099 = vadd.s32 %v1098, %v1096
        %v1100 = vand.u32 %v1057, 65535
        %v1101 = vshra.s32 %v1057, 16
        %v1102 = vcvt.s32.f32 %v1100
        %v1103 = vcvt.s32.f32 %v1101
        %1104 = vmin.xlane.f32.xlu0 %v1103
        %v1105 = vpop.xlane.xlu0 %1104
        %vm1106 = vcmp.eq.f32.partialorder %v1103, %v1105
        %v1107 = vsel %vm1106, %v1102, inf
        %1108 = vmin.xlane.f32.xlu0 %v1107
        %v1109 = vpop.xlane.xlu0 %1108
        %v1110 = vcvt.f32.s32 %v1109
        %v1111 = vcvt.f32.s32 %v1105
        %v1112 = vshll.u32 %v1111, 16
        %v1113 = vadd.s32 %v1112, %v1110
        %vm1114 = vcmp.eq.s32.totalorder %v1049, %v1071
        %vm1115 = vcmp.eq.s32.totalorder %v1049, %v1085
        %vm1116 = vcmp.eq.s32.totalorder %v1049, %v1099
        %vm1117 = vcmp.eq.s32.totalorder %v1049, %v1113
        %v1118 = vsel %vm1114, 1, 0
        %v1119 = vsel %vm1115, 1, 0
        %v1120 = vsel %vm1116, 1, 0
        %v1121 = vsel %vm1117, 1, 0
        %v1122 = vcvt.s32.f32 %v1118
        %v1123 = vcvt.s32.f32 %v1119
        %v1124 = vcvt.s32.f32 %v1120
        %v1125 = vcvt.s32.f32 %v1121
        %1126 = vst [vmem:[%s773] sm:$0xff] %v1122
        %1127 = vst [vmem:[%s773 + $0x8] sm:$0xff] %v1123
        %1128 = vst [vmem:[%s773 + $0x10] sm:$0xff] %v1124
        %1129 = vst [vmem:[%s773 + $0x18] sm:$0xff] %v1125
        %v1130 = vld [vmem:[%s656] sm:$0xf]
        %v1131 = vld [vmem:[%s10] sm:$0xf]
        %v1132 = vld [vmem:[%s10 + $0x4] sm:$0xf]
        %v1133 = vld [vmem:[%s10 + $0x8] sm:$0xf]
        %v1134 = vld [vmem:[%s10 + $0xc] sm:$0xf]
        %v1135 = vld [vmem:[#allocation17] sm:$0x1]
        %v1137 = vlaneseq
        %v1138 = vshrl.u32 %v1137, 7
        %v1139 = vsub.s32 0, %v1138
        %v1140 = vrot.slane %v1135, %v1139
        %v1146 = vunpack.c.l.b16 %v1131
        %v1147 = vunpack.c.l.b16 %v1132
        %v1148 = vunpack.c.l.b16 %v1133
        %v1149 = vunpack.c.l.b16 %v1134
        %v1150 = vpack.c.b16 %v1147, %v1146
        %v1151 = vpack.c.b16 %v1149, %v1148
        %vm1154 = vcmask 261120
        %v1156 = vsel %vm1154, %v1130, 0
        %1158 = vmatprep.subr.bf16.mxu0 0
        %1159 = vmatpush1.bf16.msra.mxu0 %v1150
        %1160 = vmatprep.subr.bf16.mxu0 0
        %1161 = vmatpush1.bf16.msra.mxu0 %v1151
        %1162 = vmatprep.subr.bf16.mxu0 0
        %1163 = vmatpush1.bf16.msra.mxu0 0
        %1164 = vmatprep.subr.bf16.mxu0 0
        %1165 = vmatpush1.bf16.msra.mxu0 0
        %1166 = vmatprep.subr.bf16.mxu0 0
        %1167 = vmatpush1.bf16.msra.mxu0 0
        %1168 = vmatprep.subr.bf16.mxu0 0
        %1169 = vmatpush1.bf16.msra.mxu0 0
        %1170 = vmatprep.subr.bf16.mxu0 0
        %1171 = vmatpush1.bf16.msra.mxu0 0
        %1172 = vmatprep.subr.bf16.mxu0 0
        %1173 = vmatpush1.bf16.msra.mxu0 0
        %1174 = vmatprep.subr.bf16.mxu0 0
        %1175 = vmatpush1.bf16.msra.mxu0 0
        %1176 = vmatprep.subr.bf16.mxu0 0
        %1177 = vmatpush1.bf16.msra.mxu0 0
        %1178 = vmatprep.subr.bf16.mxu0 0
        %1179 = vmatpush1.bf16.msra.mxu0 0
        %1180 = vmatprep.subr.bf16.mxu0 0
        %1181 = vmatpush1.bf16.msra.mxu0 0
        %1182 = vmatprep.subr.bf16.mxu0 0
        %1183 = vmatpush1.bf16.msra.mxu0 0
        %1184 = vmatprep.subr.bf16.mxu0 0
        %1185 = vmatpush1.bf16.msra.mxu0 0
        %1186 = vmatprep.subr.bf16.mxu0 0
        %1187 = vmatpush1.bf16.msra.mxu0 0
        %1188 = vmatprep.subr.bf16.mxu0 0
        %1189 = vmatpush1.bf16.msra.mxu0 0
        %1190 = vmatprep.mubr.bf16.mxu0 0
        %1191 = vmatmul.mubr.bf16.gmra.mrb[0].mxu0 %v1156
        %v1192 = vpop.f32.mrb[0].mxu0
        %v1193 = vadd.f32 %v1140, %v1192
        %v1194 = vpop.f32.mrb[0].mxu0
        %v1195 = vpop.f32.mrb[0].mxu0
        %v1196 = vpop.f32.mrb[0].mxu0
        %1197 = vdwg.mxu0
        %vm1198 = vcmp.gt.f32.partialorder %v1193, 0.0
        %v1199 = vmul.f32 %v1193, 0.02
        %v1200 = vsel %vm1198, %v1193, %v1199
        %v1201 = vpack.c.bf16 %v1200, %v1200
        %v1202 = vld [vmem:[#allocation19] sm:$0xf]
        %v1203 = vld [vmem:[#allocation19 + $0x4] sm:$0xf]
        %v1204 = vld [vmem:[#allocation19 + $0x8] sm:$0xf]
        %v1205 = vld [vmem:[#allocation19 + $0xc] sm:$0xf]
        %v1206 = vld [vmem:[#allocation20] sm:$0x1]
        %v1208 = vlaneseq
        %v1209 = vshrl.u32 %v1208, 7
        %v1210 = vsub.s32 0, %v1209
        %v1211 = vrot.slane %v1206, %v1210
        %v1217 = vunpack.c.l.b16 %v1202
        %v1218 = vunpack.c.l.b16 %v1203
        %v1219 = vunpack.c.l.b16 %v1204
        %v1220 = vunpack.c.l.b16 %v1205
        %v1221 = vpack.c.b16 %v1218, %v1217
        %v1222 = vpack.c.b16 %v1220, %v1219
        %v1226 = vsel %vm1154, %v1201, 0
        %1228 = vmatprep.subr.bf16.mxu0 0
        %1229 = vmatpush1.bf16.msra.mxu0 %v1221
        %1230 = vmatprep.subr.bf16.mxu0 0
        %1231 = vmatpush1.bf16.msra.mxu0 %v1222
        %1232 = vmatprep.subr.bf16.mxu0 0
        %1233 = vmatpush1.bf16.msra.mxu0 0
        %1234 = vmatprep.subr.bf16.mxu0 0
        %1235 = vmatpush1.bf16.msra.mxu0 0
        %1236 = vmatprep.subr.bf16.mxu0 0
        %1237 = vmatpush1.bf16.msra.mxu0 0
        %1238 = vmatprep.subr.bf16.mxu0 0
        %1239 = vmatpush1.bf16.msra.mxu0 0
        %1240 = vmatprep.subr.bf16.mxu0 0
        %1241 = vmatpush1.bf16.msra.mxu0 0
        %1242 = vmatprep.subr.bf16.mxu0 0
        %1243 = vmatpush1.bf16.msra.mxu0 0
        %1244 = vmatprep.subr.bf16.mxu0 0
        %1245 = vmatpush1.bf16.msra.mxu0 0
        %1246 = vmatprep.subr.bf16.mxu0 0
        %1247 = vmatpush1.bf16.msra.mxu0 0
        %1248 = vmatprep.subr.bf16.mxu0 0
        %1249 = vmatpush1.bf16.msra.mxu0 0
        %1250 = vmatprep.subr.bf16.mxu0 0
        %1251 = vmatpush1.bf16.msra.mxu0 0
        %1252 = vmatprep.subr.bf16.mxu0 0
        %1253 = vmatpush1.bf16.msra.mxu0 0
        %1254 = vmatprep.subr.bf16.mxu0 0
        %1255 = vmatpush1.bf16.msra.mxu0 0
        %1256 = vmatprep.subr.bf16.mxu0 0
        %1257 = vmatpush1.bf16.msra.mxu0 0
        %1258 = vmatprep.subr.bf16.mxu0 0
        %1259 = vmatpush1.bf16.msra.mxu0 0
        %1260 = vmatprep.mubr.bf16.mxu0 0
        %1261 = vmatmul.mubr.bf16.gmra.mrb[0].mxu0 %v1226
        %v1262 = vpop.f32.mrb[0].mxu0
        %v1263 = vadd.f32 %v1211, %v1262
        %v1264 = vpop.f32.mrb[0].mxu0
        %v1265 = vpop.f32.mrb[0].mxu0
        %v1266 = vpop.f32.mrb[0].mxu0
        %1267 = vdwg.mxu0
        %vm1268 = vcmp.gt.f32.partialorder %v1263, 0.0
        %v1269 = vmul.f32 %v1263, 0.02
        %v1270 = vsel %vm1268, %v1263, %v1269
        %v1271 = vpack.c.bf16 %v1270, %v1270
        %v1272 = vld [vmem:[%s14] sm:$0xff]
        %v1273 = vld [vmem:[%s14 + $0x8] sm:$0xf]
        %v1274 = vld [vmem:[%s14 + $0xc] sm:$0xff]
        %v1275 = vld [vmem:[%s14 + $0x14] sm:$0xf]
        %v1276 = vld [vmem:[%s14 + $0x18] sm:$0xff]
        %v1277 = vld [vmem:[%s14 + $0x20] sm:$0xf]
        %v1278 = vld [vmem:[%s14 + $0x24] sm:$0xff]
        %v1279 = vld [vmem:[%s14 + $0x2c] sm:$0xf]
        %v1280 = vld [vmem:[%s14 + $0x30] sm:$0xff]
        %v1281 = vld [vmem:[%s14 + $0x38] sm:$0xf]
        %v1282 = vld [vmem:[%s14 + $0x3c] sm:$0xff]
        %v1283 = vld [vmem:[%s14 + $0x44] sm:$0xf]
        %v1284 = vld [vmem:[%s15] sm:$0x7]
        %v1286 = vlaneseq
        %v1287 = vshrl.u32 %v1286, 7
        %v1288 = vsub.s32 0, %v1287
        %v1289 = vrot.slane %v1284, %v1288
        %v1290 = vlaneseq
        %v1291 = vshrl.u32 %v1290, 7
        %v1292 = vsub.s32 1, %v1291
        %v1293 = vrot.slane %v1284, %v1292
        %v1294 = vlaneseq
        %v1295 = vshrl.u32 %v1294, 7
        %v1296 = vsub.s32 2, %v1295
        %v1297 = vrot.slane %v1284, %v1296
        %v1313 = vunpack.c.l.b16 %v1272
        %v1314 = vunpack.c.h.b16 %v1272
        %v1315 = vunpack.c.l.b16 %v1273
        %v1316 = vunpack.c.l.b16 %v1274
        %v1317 = vunpack.c.h.b16 %v1274
        %v1318 = vunpack.c.l.b16 %v1275
        %v1319 = vunpack.c.l.b16 %v1276
        %v1320 = vunpack.c.h.b16 %v1276
        %v1321 = vunpack.c.l.b16 %v1277
        %v1322 = vunpack.c.l.b16 %v1278
        %v1323 = vunpack.c.h.b16 %v1278
        %v1324 = vunpack.c.l.b16 %v1279
        %v1325 = vunpack.c.l.b16 %v1280
        %v1326 = vunpack.c.h.b16 %v1280
        %v1327 = vunpack.c.l.b16 %v1281
        %v1328 = vunpack.c.l.b16 %v1282
        %v1329 = vunpack.c.h.b16 %v1282
        %v1330 = vunpack.c.l.b16 %v1283
        %v1331 = vpack.c.b16 %v1316, %v1313
        %v1332 = vpack.c.b16 %v1317, %v1314
        %v1333 = vpack.c.b16 %v1318, %v1315
        %v1334 = vpack.c.b16 %v1322, %v1319
        %v1335 = vpack.c.b16 %v1323, %v1320
        %v1336 = vpack.c.b16 %v1324, %v1321
        %v1337 = vpack.c.b16 %v1328, %v1325
        %v1338 = vpack.c.b16 %v1329, %v1326
        %v1339 = vpack.c.b16 %v1330, %v1327
        %vm1349 = vcmask 392192
        %v1351 = vsel %vm1349, %v1271, 0
        %1353 = vmatprep.subr.bf16.mxu0 %v1332
        %1354 = vmatpush1.bf16.msra.mxu0 %v1331
        %1355 = vmatprep.subr.bf16.mxu0 %v1335
        %1356 = vmatpush1.bf16.msra.mxu0 %v1334
        %1357 = vmatprep.subr.bf16.mxu0 %v1338
        %1358 = vmatpush1.bf16.msra.mxu0 %v1337
        %1359 = vmatprep.subr.bf16.mxu0 0
        %1360 = vmatpush1.bf16.msra.mxu0 0
        %1361 = vmatprep.subr.bf16.mxu0 0
        %1362 = vmatpush1.bf16.msra.mxu0 0
        %1363 = vmatprep.subr.bf16.mxu0 0
        %1364 = vmatpush1.bf16.msra.mxu0 0
        %1365 = vmatprep.subr.bf16.mxu0 0
        %1366 = vmatpush1.bf16.msra.mxu0 0
        %1367 = vmatprep.subr.bf16.mxu0 0
        %1368 = vmatpush1.bf16.msra.mxu0 0
        %1369 = vmatprep.subr.bf16.mxu0 0
        %1370 = vmatpush1.bf16.msra.mxu0 0
        %1371 = vmatprep.subr.bf16.mxu0 0
        %1372 = vmatpush1.bf16.msra.mxu0 0
        %1373 = vmatprep.subr.bf16.mxu0 0
        %1374 = vmatpush1.bf16.msra.mxu0 0
        %1375 = vmatprep.subr.bf16.mxu0 0
        %1376 = vmatpush1.bf16.msra.mxu0 0
        %1377 = vmatprep.subr.bf16.mxu0 0
        %1378 = vmatpush1.bf16.msra.mxu0 0
        %1379 = vmatprep.subr.bf16.mxu0 0
        %1380 = vmatpush1.bf16.msra.mxu0 0
        %1381 = vmatprep.subr.bf16.mxu0 0
        %1382 = vmatpush1.bf16.msra.mxu0 0
        %1383 = vmatprep.subr.bf16.mxu0 0
        %1384 = vmatpush1.bf16.msra.mxu0 0
        %1385 = vmatprep.mubr.bf16.mxu0 0
        %1386 = vmatmul.mubr.bf16.gmra.mrb[0].mxu0 %v1351
        %v1387 = vpop.f32.mrb[0].mxu0
        %v1388 = vadd.f32 %v1289, %v1387
        %v1389 = vpop.f32.mrb[0].mxu0
        %v1390 = vadd.f32 %v1293, %v1389
        %v1391 = vpop.f32.mrb[0].mxu0
        %v1392 = vpop.f32.mrb[0].mxu0
        %1393 = vdwg.mxu0
        %1394 = vmatprep.subr.bf16.mxu0 0
        %1395 = vmatpush1.bf16.msra.mxu0 %v1333
        %1396 = vmatprep.subr.bf16.mxu0 0
        %1397 = vmatpush1.bf16.msra.mxu0 %v1336
        %1398 = vmatprep.subr.bf16.mxu0 0
        %1399 = vmatpush1.bf16.msra.mxu0 %v1339
        %1400 = vmatprep.subr.bf16.mxu0 0
        %1401 = vmatpush1.bf16.msra.mxu0 0
        %1402 = vmatprep.subr.bf16.mxu0 0
        %1403 = vmatpush1.bf16.msra.mxu0 0
        %1404 = vmatprep.subr.bf16.mxu0 0
        %1405 = vmatpush1.bf16.msra.mxu0 0
        %1406 = vmatprep.subr.bf16.mxu0 0
        %1407 = vmatpush1.bf16.msra.mxu0 0
        %1408 = vmatprep.subr.bf16.mxu0 0
        %1409 = vmatpush1.bf16.msra.mxu0 0
        %1410 = vmatprep.subr.bf16.mxu0 0
        %1411 = vmatpush1.bf16.msra.mxu0 0
        %1412 = vmatprep.subr.bf16.mxu0 0
        %1413 = vmatpush1.bf16.msra.mxu0 0
        %1414 = vmatprep.subr.bf16.mxu0 0
        %1415 = vmatpush1.bf16.msra.mxu0 0
        %1416 = vmatprep.subr.bf16.mxu0 0
        %1417 = vmatpush1.bf16.msra.mxu0 0
        %1418 = vmatprep.subr.bf16.mxu0 0
        %1419 = vmatpush1.bf16.msra.mxu0 0
        %1420 = vmatprep.subr.bf16.mxu0 0
        %1421 = vmatpush1.bf16.msra.mxu0 0
        %1422 = vmatprep.subr.bf16.mxu0 0
        %1423 = vmatpush1.bf16.msra.mxu0 0
        %1424 = vmatprep.subr.bf16.mxu0 0
        %1425 = vmatpush1.bf16.msra.mxu0 0
        %1426 = vmatprep.mubr.bf16.mxu0 0
        %1427 = vmatmul.mubr.bf16.gmra.mrb[0].mxu0 %v1351
        %v1428 = vpop.f32.mrb[0].mxu0
        %v1429 = vadd.f32 %v1297, %v1428
        %v1430 = vpop.f32.mrb[0].mxu0
        %v1431 = vpop.f32.mrb[0].mxu0
        %v1432 = vpop.f32.mrb[0].mxu0
        %1433 = vdwg.mxu0
        %v1434 = vld [vmem:[%s674] sm:$0xff]
        %v1435 = vld [vmem:[%s674 + $0x8] sm:$0xff]
        %v1436 = vld [vmem:[%s674 + $0x10] sm:$0xff]
        %v1437 = vadd.f32 %v1388, %v1434
        %v1438 = vadd.f32 %v1390, %v1435
        %v1439 = vadd.f32 %v1429, %v1436
        %v1440 = vmax.f32 %v1437, %v1438
        %v1441 = vmax.f32 %v1440, %v1439
        %vm1442 = vcmp.eq.f32.partialorder %v1437, %v1441
        %vm1443 = vcmp.eq.f32.partialorder 0.0, 0.0
        %vm1444 = vmand %vm1442, %vm1443
        %v1445 = vsel %vm1444, 1.0, 0.0
        %v1446 = vadd.f32 %v1445, 0.0
        %vm1447 = vcmp.eq.f32.partialorder %v1438, %v1441
        %vm1448 = vcmp.eq.f32.partialorder %v1446, 0.0
        %vm1449 = vmand %vm1447, %vm1448
        %v1450 = vsel %vm1449, 1.0, 0.0
        %v1451 = vadd.f32 %v1446, %v1450
        %vm1452 = vcmp.eq.f32.partialorder %v1439, %v1441
        %vm1453 = vcmp.eq.f32.partialorder %v1451, 0.0
        %vm1454 = vmand %vm1452, %vm1453
        %v1455 = vsel %vm1454, 1.0, 0.0
        %1456 = vst [vmem:[%s780] sm:$0xff] %v1445
        %1457 = vst [vmem:[%s780 + $0x8] sm:$0xff] %v1450
        %1458 = vst [vmem:[%s780 + $0x10] sm:$0xff] %v1455
        %s1459 = sand.u32 %s410, 1
        %s1460 = scalar_lea.sflag [#allocation4], %s1459
        %s1461 = sand.u32 %s410, 1
        %s1462 = smul.addr %s1461, 32
        %s1463 = scalar_lea.vmem [#allocation22], %s1462
        %s1464 = sand.u32 %s436, 1
        %s1465 = scalar_lea.sflag [#allocation24], %s1464
        %s1466 = sand.u32 %s436, 1
        %s1467 = smul.addr %s1466, 24
        %s1468 = scalar_lea.vmem [#allocation23], %s1467
        // Predicated region
        $region133: #{tpu_custom_call.1} parent=83 // pred_check
          %p1469 = pneg %p420
        $region134: #{tpu_custom_call.1} parent=83 // pred_check_branch
          %1471 = sbr.rel (%p1469) target = $region136
        $region135: #{tpu_custom_call.1} parent=83 // pred_region
          %s1472 = smul.u32 4, %s46
          %s1474 = ssub.s32 512, 512
          %1475 = vsyncadd %s1460, %s1474
          %s1476 = smul.addr %s1472, 128
          %s1477 = scalar_lea.hbm %s16, %s1476
          %s1478 = sshll.u32 %s1463, 4
          %s1479 = int_to_ptr.vmem [resolvable:$true] %s1478
          %1484 = dma.vmem_to_hbm [thread:$0]  %s1479, 512, %s1477, %s1460, 128, 128, 8
        $region136: #{tpu_custom_call.1} parent=83 // pred_fallthru
          _
        // Predicated region
        $region137: #{tpu_custom_call.1} parent=83 // pred_check
          %p1485 = pneg %p446
        $region138: #{tpu_custom_call.1} parent=83 // pred_check_branch
          %1487 = sbr.rel (%p1485) target = $region140
        $region139: #{tpu_custom_call.1} parent=83 // pred_region
          %s1489 = ssub.s32 384, 384
          %1490 = vsyncadd %s1465, %s1489
          %s1491 = smul.addr %s46, 3
          %s1492 = smul.addr %s1491, 128
          %s1493 = scalar_lea.hbm %s17, %s1492
          %s1495 = sshll.u32 %s1468, 4
          %s1496 = int_to_ptr.vmem [resolvable:$true] %s1495
          %1498 = dma.vmem_to_hbm [thread:$0]  %s1496, 384, %s1493, %s1465
        $region140: #{tpu_custom_call.1} parent=83 // pred_fallthru
          _
      $region84: #{tpu_custom_call.1} parent=5 // pred_fallthru
        _
      %p1499 = scmp.le.s32.totalorder 2, %s41
      // Predicated region
      $region141: #{tpu_custom_call.1} parent=5 // pred_check
        %p1500 = pneg %p1499
      $region142: #{tpu_custom_call.1} parent=5 // pred_check_branch
        %1502 = sbr.rel (%p1500) target = $region144
      $region143: #{tpu_custom_call.1} parent=5 // pred_region
        %s1503 = ssub.s32 %s41, 2
        // Predicated region
        $region145: #{tpu_custom_call.1} parent=143 // pred_check
          %p1504 = pneg %p426
        $region146: #{tpu_custom_call.1} parent=143 // pred_check_branch
          %1506 = sbr.rel (%p1504) target = $region148
        $region147: #{tpu_custom_call.1} parent=143 // pred_region
          %s1507 = sand.u32 %s411, 1
          %s1508 = scalar_lea.sflag [#allocation4], %s1507
          %s1509 = sand.u32 %s411, 1
          %s1510 = smul.addr %s1509, 32
          %s1511 = scalar_lea.vmem [#allocation22], %s1510
          %1512 = dma.done %s1508, 512
        $region148: #{tpu_custom_call.1} parent=143 // pred_fallthru
          _
        // Predicated region
        $region149: #{tpu_custom_call.1} parent=143 // pred_check
          %p1513 = pneg %p452
        $region150: #{tpu_custom_call.1} parent=143 // pred_check_branch
          %1515 = sbr.rel (%p1513) target = $region152
        $region151: #{tpu_custom_call.1} parent=143 // pred_region
          %s1516 = sand.u32 %s437, 1
          %s1517 = scalar_lea.sflag [#allocation24], %s1516
          %s1518 = sand.u32 %s437, 1
          %s1519 = smul.addr %s1518, 24
          %s1520 = scalar_lea.vmem [#allocation23], %s1519
          %1521 = dma.done %s1517, 384
        $region152: #{tpu_custom_call.1} parent=143 // pred_fallthru
          _
      $region144: #{tpu_custom_call.1} parent=5 // pred_fallthru
        _
    $region6: #{tpu_custom_call.1} parent=1 // loop_footer
      %s45 = sadd.s32 1, %s41
    $region7: #{tpu_custom_call.1} parent=1 // loop_footer_branch
      %40 = sbr.rel target = $region3
    $region8: #{tpu_custom_call.1} parent=1 // loop_exit
      _
    %1522 = vsyncpa [#allocation3], 1
    %s1523 = scalar_lea.sflag [#allocation3], 1
    %1524 = vsyncpa %s1523, 1
    %1525 = vsyncpa [#allocation6], 1
    %s1526 = scalar_lea.sflag [#allocation6], 1
    %1527 = vsyncpa %s1526, 1
    %1528 = vsyncpa [#allocation9], 1
    %1529 = vsyncpa [#allocation12], 1
    %1530 = vsyncpa [#allocation15], 1
    %1531 = vsyncpa [#allocation18], 1
    %1532 = vsyncpa [#allocation21], 1
    %1533 = vsyncpa [#allocation4], 1
    %s1534 = scalar_lea.sflag [#allocation4], 1
    %1535 = vsyncpa %s1534, 1
    %1536 = vsyncpa [#allocation24], 1
    %s1537 = scalar_lea.sflag [#allocation24], 1
    %1538 = vsyncpa %s1537, 1

</llo_original>
